<compile_context>
chip_gen: v7x
topology: tpu7x:2x2x1
jax: 0.10.0
libtpu: 0.0.40
codegen_flags: <defaults>
</compile_context>

<pallas_src>
import functools

import jax
import jax.numpy as jnp
import numpy as np
from jax import lax
from jax.experimental import pallas as pl
from jax.experimental.pallas import tpu as pltpu


def _round_up(x, m):
    return ((x + m - 1) // m) * m


def _vmem_capacity_bytes():
    try:
        return int(pltpu.get_tpu_info().vmem_capacity_bytes)
    except Exception:
        return 64 * 1024 * 1024          # conservative fallback (v7x per-TC VMEM)


def _gate_pad_cols(w, H, H_pad):
    """Reorder PyTorch gates [i,f,g,o] -> [i,f,o,g]; pad each gate block to H_pad lanes.

    The [i,f,o,g] order keeps the three sigmoid gates in one contiguous lane-aligned
    3*H_pad slice (single tanh-based sigmoid in the kernel). Padded columns are zero,
    which keeps padded h/c lanes exactly 0 from the zero initial state.
    """
    order = (0, 1, 3, 2)                 # i, f, o, g
    parts = []
    zeros = None
    if H_pad > H:
        zeros = jnp.zeros(w.shape[:-1] + (H_pad - H,), w.dtype)
    for k in order:
        parts.append(w[..., k * H:(k + 1) * H])
        if zeros is not None:
            parts.append(zeros)
    return jnp.concatenate(parts, axis=-1)


# --------------------------- Pallas recurrent kernel ---------------------------
def _lstm_recurrent_kernel(gx_ref, whh_hbm, out_ref, whh_vmem, h_sc, c_sc, dma_sem,
                           *, h_pad, t_blk, unroll):
    d = pl.program_id(0)                 # direction: 0 = forward, 1 = backward
    tb = pl.program_id(1)                # blocked time (sequential / "arbitrary")

    @pl.when(tb == 0)
    def _():
        # Fresh recurrence per direction: zero state and load this direction's W_hh once
        # into a single resident VMEM buffer (no double-buffered weight stream).
        h_sc[...] = jnp.zeros_like(h_sc)
        c_sc[...] = jnp.zeros_like(c_sc)
        cp = pltpu.make_async_copy(whh_hbm.at[d], whh_vmem, dma_sem)
        cp.start()
        cp.wait()

    H = h_pad
    whh = whh_vmem[...]                  # (H_pad, 4*H_pad) bf16, resident across time blocks
    reverse = d == 1

    def step(s, carry):
        h, c = carry
        t = jnp.where(reverse, t_blk - 1 - s, s)
        # Only the recurrent matmul runs here; x @ W_ih^T + b was precomputed (bf16 gx).
        gates = gx_ref[t].astype(jnp.float32) + jnp.dot(
            h.astype(whh.dtype), whh, preferred_element_type=jnp.float32)
        # Padded gate layout [i, f, o, g]; one EUP tanh covers all three sigmoids.
        sig = 0.5 * jnp.tanh(0.5 * gates[:, 0:3 * H]) + 0.5
        i_g = sig[:, 0 * H:1 * H]
        f_g = sig[:, 1 * H:2 * H]
        o_g = sig[:, 2 * H:3 * H]
        g_g = jnp.tanh(gates[:, 3 * H:4 * H])
        c = f_g * c + i_g * g_g
        h = o_g * jnp.tanh(c)
        out_ref[t] = h.astype(out_ref.dtype)
        return h, c

    # Partial unroll: LLO scheduling visibility without blowing vreg pressure / spills.
    h, c = lax.fori_loop(0, t_blk, step, (h_sc[...], c_sc[...]), unroll=unroll)
    h_sc[...] = h
    c_sc[...] = c


def lstm_layer_pallas(x, dir_params, *, batch_first_in, t_blk_max=64, unroll=8,
                      mxu_dtype=jnp.bfloat16):
    """One LSTM layer (all directions fused).

    x          : (bsz, slen, in) if batch_first_in else (slen, bsz, in)
    dir_params : [(w_ih, w_hh, b_ih, b_hh)] per direction (forward[, backward]),
                 PyTorch layouts: w_ih (4H, in), w_hh (4H, H), b_* (4H,)
    Returns (ndir, slen, bsz, H) time-major hidden sequences (mxu_dtype); the backward
    direction is stored un-reversed (index t holds the backward hidden at time t).
    """
    ndir = len(dir_params)
    H = dir_params[0][1].shape[1]
    H_pad = _round_up(H, 128)
    dsize = jnp.dtype(mxu_dtype).itemsize

    # ---- Phase 1 (time-parallel, XLA): bf16 input projection, all steps & directions. ----
    wih_p = jnp.stack([
        _gate_pad_cols(jnp.asarray(w_ih, jnp.float32).T, H, H_pad)
        for (w_ih, _, _, _) in dir_params])                                    # (ndir, in, 4*H_pad)
    bias_p = jnp.stack([
        _gate_pad_cols(jnp.asarray(b_ih + b_hh, jnp.float32)[None], H, H_pad)
        for (_, _, b_ih, b_hh) in dir_params])                                 # (ndir, 1, 4*H_pad)
    eq = "bti,dig->dtbg" if batch_first_in else "tbi,dig->dtbg"
    gx = jnp.einsum(eq, x.astype(mxu_dtype), wih_p.astype(mxu_dtype),
                    preferred_element_type=jnp.float32)
    gx = gx + bias_p[:, None]                                                  # (ndir, T, B, 4*H_pad) f32

    slen, bsz = gx.shape[1], gx.shape[2]
    bsz_pad = _round_up(bsz, 16)         # bf16 LHS min sublane tile

    # ---- VMEM budgeting (per chip generation): largest t_blk whose double-buffered
    #      bf16 gx/out streams + resident W_hh + f32 h/c carry fit comfortably. ----
    vmem_cap = _vmem_capacity_bytes()
    per_t = 2 * bsz_pad * (4 * H_pad + H_pad) * dsize            # 2 bufs * (gx + out) / step
    fixed = H_pad * 4 * H_pad * dsize + 2 * bsz_pad * H_pad * 4  # resident W_hh + h/c carry
    budget = int(0.6 * vmem_cap)
    by_budget = max(1, (budget - fixed) // per_t)
    t_blk = int(max(1, min(t_blk_max, slen, by_budget)))
    est = fixed + per_t * t_blk
    vmem_limit = int(min(0.85 * vmem_cap, max(32 << 20, est + (16 << 20))))

    slen_pad = _round_up(slen, t_blk)
    n_tb = slen_pad // t_blk
    # Zero time/gate padding keeps padded lanes and padded (reverse-processed-first) time
    # steps exactly 0 from the zero initial state, so the math is unchanged.
    # NOTE: this relies on h0 = c0 = 0 (the module's zero init_hidden / init_c).
    gx = jnp.pad(gx, ((0, 0), (0, slen_pad - slen), (0, bsz_pad - bsz), (0, 0)))
    gx = gx.astype(mxu_dtype)                                                  # bf16 HBM stream

    whh_p = jnp.stack([
        jnp.pad(_gate_pad_cols(jnp.asarray(w_hh, jnp.float32).T, H, H_pad),
                ((0, H_pad - H), (0, 0)))
        for (_, w_hh, _, _) in dir_params]).astype(mxu_dtype)                  # (ndir, H_pad, 4*H_pad)

    def io_map(d, tb):
        # Forward walks time blocks 0..n_tb-1; backward walks them in reverse (the
        # in-block order is also reversed inside the kernel) -> no [::-1] HBM copies.
        return (d, (1 - d) * tb + d * (n_tb - 1 - tb), 0, 0)

    kernel = functools.partial(_lstm_recurrent_kernel, h_pad=H_pad, t_blk=t_blk,
                               unroll=int(min(unroll, t_blk)))

    out_p = pl.pallas_call(
        kernel,
        out_shape=jax.ShapeDtypeStruct((ndir, slen_pad, bsz_pad, H_pad), mxu_dtype),
        grid_spec=pltpu.PrefetchScalarGridSpec(
            num_scalar_prefetch=0,
            # Direction is embarrassingly parallel (second TensorCore on v7x); the blocked
            # time axis carries the recurrence and stays strictly sequential.
            grid=(ndir, n_tb),
            in_specs=[
                pl.BlockSpec((pl.Squeezed(), t_blk, bsz_pad, 4 * H_pad), io_map),
                pl.BlockSpec(memory_space=pl.ANY),       # stacked W_hh stays in HBM
            ],
            out_specs=pl.BlockSpec((pl.Squeezed(), t_blk, bsz_pad, H_pad), io_map),
            scratch_shapes=[
                pltpu.VMEM((H_pad, 4 * H_pad), mxu_dtype),    # resident W_hh (single buffer)
                pltpu.VMEM((bsz_pad, H_pad), jnp.float32),    # h carry (f32 across steps)
                pltpu.VMEM((bsz_pad, H_pad), jnp.float32),    # c carry (f32 across steps)
                pltpu.SemaphoreType.DMA(()),
            ],
        ),
        compiler_params=pltpu.CompilerParams(
            dimension_semantics=("parallel", "arbitrary"),
            vmem_limit_bytes=vmem_limit),
    )(gx, whh_p)

    return out_p[:, :slen, :bsz, :H]


# --------------------------- EncoderLSTM forward (eval) ---------------------------
def encoder_lstm_forward(x, params, *, concat=True, return_last=False, bidir=False,
                         t_blk_max=64, unroll=8, mxu_dtype=jnp.bfloat16):
    """EncoderLSTM.forward (eval mode, input_lengths=None).

    x      : (bsz, slen, input_size) batch-first, like the PyTorch module.
    params : list of per-layer dicts with keys 'fwd' (w_ih, w_hh, b_ih, b_hh)
             and optionally 'bwd' when bidir.
    """
    bsz, slen, _ = x.shape
    cur = x
    batch_first = True                   # only the raw input is batch-first; layers run time-major
    outputs = []
    for layer in params:
        # LockedDropout: identity in eval mode.
        dir_params = [layer["fwd"]] + ([layer["bwd"]] if bidir else [])
        outs = lstm_layer_pallas(cur, dir_params, batch_first_in=batch_first,
                                 t_blk_max=t_blk_max, unroll=unroll, mxu_dtype=mxu_dtype)
        out_tm = jnp.concatenate([outs[0], outs[1]], axis=-1) if bidir else outs[0]
        cur = out_tm                     # stays bf16 time-major for the next layer's matmul
        batch_first = False
        if return_last:
            if bidir:
                last = jnp.concatenate([outs[0, slen - 1], outs[1, 0]], axis=-1)  # (bsz, 2H)
            else:
                last = outs[0, slen - 1]                                          # (bsz, H)
            outputs.append(last.astype(jnp.float32))
        else:
            outputs.append(out_tm)

    if return_last:
        return jnp.concatenate(outputs, axis=-1) if concat else outputs[-1]
    cat_tm = jnp.concatenate(outputs, axis=-1) if concat else outputs[-1]
    return jnp.transpose(cat_tm, (1, 0, 2)).astype(jnp.float32)   # back to batch-first, f32


# ---------------- pure-JAX reference (for correctness check) ----------------
def _lstm_layer_ref(x_tm, w_ih, w_hh, b_ih, b_hh):
    slen, bsz, _ = x_tm.shape
    H = w_hh.shape[1]
    b = (b_ih + b_hh)[None, :]

    def step(carry, x_t):
        h, c = carry
        gates = x_t @ w_ih.T + h @ w_hh.T + b
        i = jax.nn.sigmoid(gates[:, 0 * H:1 * H])
        f = jax.nn.sigmoid(gates[:, 1 * H:2 * H])
        g = jnp.tanh(gates[:, 2 * H:3 * H])
        o = jax.nn.sigmoid(gates[:, 3 * H:4 * H])
        c = f * c + i * g
        h = o * jnp.tanh(c)
        return (h, c), h

    h0 = jnp.zeros((bsz, H), jnp.float32)
    (_, _), ys = jax.lax.scan(step, (h0, h0), x_tm)
    return ys


def encoder_lstm_ref(x, params, *, concat=True, bidir=False):
    output = x
    outputs = []
    for layer in params:
        x_tm = jnp.transpose(output, (1, 0, 2))
        w_ih, w_hh, b_ih, b_hh = layer["fwd"]
        out_tm = _lstm_layer_ref(x_tm, w_ih, w_hh, b_ih, b_hh)
        if bidir:
            w_ih_r, w_hh_r, b_ih_r, b_hh_r = layer["bwd"]
            out_b = _lstm_layer_ref(x_tm[::-1], w_ih_r, w_hh_r, b_ih_r, b_hh_r)[::-1]
            out_tm = jnp.concatenate([out_tm, out_b], axis=-1)
        output = jnp.transpose(out_tm, (1, 0, 2))
        outputs.append(output)
    return jnp.concatenate(outputs, axis=2) if concat else outputs[-1]


# --------------------------------- demo --------------------------------------
def make_params(key, input_size, num_units, nlayers, bidir):
    """Deterministic init: weights ~ N(0, 0.1) (reset_parameters), biases zero."""
    params = []
    ndir = 2 if bidir else 1
    for i in range(nlayers):
        in_dim = input_size if i == 0 else num_units * ndir
        layer = {}
        for dname in (["fwd", "bwd"] if bidir else ["fwd"]):
            key, k1, k2 = jax.random.split(key, 3)
            w_ih = 0.1 * jax.random.normal(k1, (4 * num_units, in_dim), jnp.float32)
            w_hh = 0.1 * jax.random.normal(k2, (4 * num_units, num_units), jnp.float32)
            b_ih = jnp.zeros((4 * num_units,), jnp.float32)
            b_hh = jnp.zeros((4 * num_units,), jnp.float32)
            layer[dname] = (w_ih, w_hh, b_ih, b_hh)
        params.append(layer)
    return params


if __name__ == "__main__":
    # EncoderLSTM(input_size=16, num_units=32, nlayers=2, concat=True,
    #             bidir=False/True, dropout=0.0, return_last=False/True), eval mode.
    bsz, slen, input_size, num_units, nlayers = 2, 8, 16, 32, 2
    key = jax.random.PRNGKey(0)
    key, kx, kp_uni, kp_bi = jax.random.split(key, 4)
    x = jax.random.normal(kx, (bsz, slen, input_size), jnp.float32)

    # --- unidirectional stack ---
    params = make_params(kp_uni, input_size, num_units, nlayers, bidir=False)
    out = encoder_lstm_forward(x, params, concat=True, return_last=False, bidir=False)
    out = jax.block_until_ready(out)
    assert out.shape == (bsz, slen, nlayers * num_units), out.shape
    ref = jax.block_until_ready(encoder_lstm_ref(x, params, concat=True, bidir=False))
    # bf16 MXU operands / bf16 gx & output streams (f32 accumulation and f32 h/c carry).
    np.testing.assert_allclose(np.asarray(out), np.asarray(ref), rtol=2e-2, atol=2e-2)

    # --- bidirectional stack (both directions fused in one pallas_call) ---
    params_bi = make_params(kp_bi, input_size, num_units, nlayers, bidir=True)
    out_bi = encoder_lstm_forward(x, params_bi, concat=True, return_last=False, bidir=True)
    out_bi = jax.block_until_ready(out_bi)
    assert out_bi.shape == (bsz, slen, nlayers * 2 * num_units), out_bi.shape
    ref_bi = jax.block_until_ready(encoder_lstm_ref(x, params_bi, concat=True, bidir=True))
    np.testing.assert_allclose(np.asarray(out_bi), np.asarray(ref_bi), rtol=2e-2, atol=2e-2)

    # --- return_last path (bidir) ---
    last = encoder_lstm_forward(x, params_bi, concat=True, return_last=True, bidir=True)
    last = jax.block_until_ready(last)
    assert last.shape == (bsz, nlayers * 2 * num_units), last.shape
    H = num_units
    ref_last = jnp.concatenate(
        [jnp.concatenate([ref_bi[:, slen - 1, l * 2 * H:l * 2 * H + H],
                          ref_bi[:, 0, l * 2 * H + H:(l + 1) * 2 * H]], axis=-1)
         for l in range(nlayers)], axis=-1)
    np.testing.assert_allclose(np.asarray(last), np.asarray(ref_last), rtol=2e-2, atol=2e-2)

    print("KERNEL_OK")
</pallas_src>

<mosaic_0001>
module attributes {stable_mosaic.version = 11 : i64} {
  func.func @_lstm_recurrent_kernel(%arg0: i32, %arg1: i32, %arg2: memref<1x8x16x512xbf16, #tpu.memory_space<vmem>>, %arg3: memref<1x128x512xbf16, #tpu.memory_space<any>>, %arg4: memref<1x8x16x128xbf16, #tpu.memory_space<vmem>>, %arg5: memref<128x512xbf16, #tpu.memory_space<vmem>>, %arg6: memref<16x128xf32, #tpu.memory_space<vmem>>, %arg7: memref<16x128xf32, #tpu.memory_space<vmem>>, %arg8: memref<!tpu.dma_semaphore, #tpu.memory_space<semaphore_mem>>) attributes {dimension_semantics = [#tpu.dimension_semantics<parallel>, #tpu.dimension_semantics<arbitrary>], iteration_bounds = array<i64: 1, 1>, scalar_prefetch = 0 : i64, scratch_operands = 4 : i64, tpu.core_type = #tpu.core_type<tc>, window_params = [{transform_indices = @transform_0, window_bounds = array<i64: 1, 8, 16, 512>}, {}, {transform_indices = @transform_2, window_bounds = array<i64: 1, 8, 16, 128>}]} {
    %c0_i32 = arith.constant 0 : i32
    %0 = arith.cmpi eq, %arg1, %c0_i32 : i32
    %1 = arith.extui %0 : i1 to i32
    %c0_i32_0 = arith.constant 0 : i32
    %2 = arith.cmpi ne, %1, %c0_i32_0 : i32
    scf.if %2 {
      %cst_99 = arith.constant 0.000000e+00 : f32
      %265 = vector.broadcast %cst_99 : f32 to vector<16x128xf32>
      %c0_100 = arith.constant 0 : index
      %c0_101 = arith.constant 0 : index
      %266 = vector.load %arg6[%c0_100, %c0_101] : memref<16x128xf32, #tpu.memory_space<vmem>>, vector<16x128xf32>
      tpu.vector_store %arg6[%c0_100, %c0_101], %265 {strides = array<i32>} : memref<16x128xf32, #tpu.memory_space<vmem>>, vector<16x128xf32>,
      %cst_102 = arith.constant 0.000000e+00 : f32
      %267 = vector.broadcast %cst_102 : f32 to vector<16x128xf32>
      %c0_103 = arith.constant 0 : index
      %c0_104 = arith.constant 0 : index
      %268 = vector.load %arg7[%c0_103, %c0_104] : memref<16x128xf32, #tpu.memory_space<vmem>>, vector<16x128xf32>
      tpu.vector_store %arg7[%c0_103, %c0_104], %267 {strides = array<i32>} : memref<16x128xf32, #tpu.memory_space<vmem>>, vector<16x128xf32>,
      %c0_i32_105 = arith.constant 0 : i32
      %c0_i32_106 = arith.constant 0 : i32
      %269 = tpu.memref_slice %arg3[%arg0, %c0_i32_105, %c0_i32_106] : memref<1x128x512xbf16, #tpu.memory_space<any>> -> memref<1x128x512xbf16, #tpu.memory_space<any>>
      %270 = tpu.memref_squeeze %269 : memref<1x128x512xbf16, #tpu.memory_space<any>> -> memref<128x512xbf16, #tpu.memory_space<any>>
      tpu.enqueue_dma source(%270 : memref<128x512xbf16, #tpu.memory_space<any>>) target(%arg5 : memref<128x512xbf16, #tpu.memory_space<vmem>>) target_semaphore(%arg8 : memref<!tpu.dma_semaphore, #tpu.memory_space<semaphore_mem>>)
      %c0_i32_107 = arith.constant 0 : i32
      %c0_i32_108 = arith.constant 0 : i32
      %271 = tpu.memref_slice %arg3[%arg0, %c0_i32_107, %c0_i32_108] : memref<1x128x512xbf16, #tpu.memory_space<any>> -> memref<1x128x512xbf16, #tpu.memory_space<any>>
      %272 = tpu.memref_squeeze %271 : memref<1x128x512xbf16, #tpu.memory_space<any>> -> memref<128x512xbf16, #tpu.memory_space<any>>
      tpu.wait_dma2 semaphore(%arg8 : memref<!tpu.dma_semaphore, #tpu.memory_space<semaphore_mem>>) src(%272 : memref<128x512xbf16, #tpu.memory_space<any>>) dst(%arg5 : memref<128x512xbf16, #tpu.memory_space<vmem>>)
    } else {
    }
    %c0 = arith.constant 0 : index
    %c0_1 = arith.constant 0 : index
    %3 = vector.load %arg5[%c0, %c0_1] : memref<128x512xbf16, #tpu.memory_space<vmem>>, vector<128x512xbf16>
    %c1_i32 = arith.constant 1 : i32
    %4 = arith.cmpi eq, %arg0, %c1_i32 : i32
    %c0_2 = arith.constant 0 : index
    %c0_3 = arith.constant 0 : index
    %5 = vector.load %arg6[%c0_2, %c0_3] : memref<16x128xf32, #tpu.memory_space<vmem>>, vector<16x128xf32>
    %c0_4 = arith.constant 0 : index
    %c0_5 = arith.constant 0 : index
    %6 = vector.load %arg7[%c0_4, %c0_5] : memref<16x128xf32, #tpu.memory_space<vmem>>, vector<16x128xf32>
    %c0_i32_6 = arith.constant 0 : i32
    %c7_i32 = arith.constant 7 : i32
    %7 = arith.subi %c7_i32, %c0_i32_6 : i32
    %8 = arith.select %4, %7, %c0_i32_6 : i32
    %c0_7 = arith.constant 0 : index
    %9 = arith.index_cast %8 : i32 to index
    %c0_8 = arith.constant 0 : index
    %c0_9 = arith.constant 0 : index
    %10 = vector.load %arg2[%c0_7, %9, %c0_8, %c0_9] : memref<1x8x16x512xbf16, #tpu.memory_space<vmem>>, vector<1x1x16x512xbf16>
    %11 = vector.shape_cast %10 : vector<1x1x16x512xbf16> to vector<16x512xbf16>
    %12 = arith.extf %11 : vector<16x512xbf16> to vector<16x512xf32>
    %13 = arith.truncf %5 : vector<16x128xf32> to vector<16x128xbf16>
    %cst = arith.constant dense<0.000000e+00> : vector<16x512xf32>
    %14 = tpu.matmul %13, %3, %cst {dimension_numbers = #tpu.dot_dimension_numbers<[1], [0], [0], [1], [0, 0, 1, 1], [], []>} : vector<16x128xbf16>, vector<128x512xbf16>, vector<16x512xf32> -> vector<16x512xf32>
    %15 = arith.addf %12, %14 : vector<16x512xf32>
    %16 = vector.extract_strided_slice %15 {offsets = [0, 0], sizes = [16, 384], strides = [1, 1]} : vector<16x512xf32> to vector<16x384xf32>
    %cst_10 = arith.constant 5.000000e-01 : f32
    %17 = vector.broadcast %cst_10 : f32 to vector<16x384xf32>
    %18 = arith.mulf %17, %16 : vector<16x384xf32>
    %19 = math.tanh %18 : vector<16x384xf32>
    %cst_11 = arith.constant 5.000000e-01 : f32
    %20 = vector.broadcast %cst_11 : f32 to vector<16x384xf32>
    %21 = arith.mulf %20, %19 : vector<16x384xf32>
    %cst_12 = arith.constant 5.000000e-01 : f32
    %22 = vector.broadcast %cst_12 : f32 to vector<16x384xf32>
    %23 = arith.addf %21, %22 : vector<16x384xf32>
    %24 = vector.extract_strided_slice %23 {offsets = [0, 0], sizes = [16, 128], strides = [1, 1]} : vector<16x384xf32> to vector<16x128xf32>
    %25 = vector.extract_strided_slice %23 {offsets = [0, 128], sizes = [16, 128], strides = [1, 1]} : vector<16x384xf32> to vector<16x128xf32>
    %26 = vector.extract_strided_slice %23 {offsets = [0, 256], sizes = [16, 128], strides = [1, 1]} : vector<16x384xf32> to vector<16x128xf32>
    %27 = vector.extract_strided_slice %15 {offsets = [0, 384], sizes = [16, 128], strides = [1, 1]} : vector<16x512xf32> to vector<16x128xf32>
    %28 = math.tanh %27 : vector<16x128xf32>
    %29 = arith.mulf %25, %6 : vector<16x128xf32>
    %30 = arith.mulf %24, %28 : vector<16x128xf32>
    %31 = arith.addf %29, %30 : vector<16x128xf32>
    %32 = math.tanh %31 : vector<16x128xf32>
    %33 = arith.mulf %26, %32 : vector<16x128xf32>
    %34 = arith.truncf %33 : vector<16x128xf32> to vector<16x128xbf16>
    %c0_13 = arith.constant 0 : index
    %35 = arith.index_cast %8 : i32 to index
    %c0_14 = arith.constant 0 : index
    %c0_15 = arith.constant 0 : index
    %36 = vector.load %arg4[%c0_13, %35, %c0_14, %c0_15] : memref<1x8x16x128xbf16, #tpu.memory_space<vmem>>, vector<1x1x16x128xbf16>
    %37 = vector.shape_cast %36 : vector<1x1x16x128xbf16> to vector<16x128xbf16>
    %38 = vector.shape_cast %34 : vector<16x128xbf16> to vector<1x1x16x128xbf16>
    tpu.vector_store %arg4[%c0_13, %35, %c0_14, %c0_15], %38 {strides = array<i32>} : memref<1x8x16x128xbf16, #tpu.memory_space<vmem>>, vector<1x1x16x128xbf16>,
    %c1_i32_16 = arith.constant 1 : i32
    %c7_i32_17 = arith.constant 7 : i32
    %39 = arith.subi %c7_i32_17, %c1_i32_16 : i32
    %40 = arith.select %4, %39, %c1_i32_16 : i32
    %c0_18 = arith.constant 0 : index
    %41 = arith.index_cast %40 : i32 to index
    %c0_19 = arith.constant 0 : index
    %c0_20 = arith.constant 0 : index
    %42 = vector.load %arg2[%c0_18, %41, %c0_19, %c0_20] : memref<1x8x16x512xbf16, #tpu.memory_space<vmem>>, vector<1x1x16x512xbf16>
    %43 = vector.shape_cast %42 : vector<1x1x16x512xbf16> to vector<16x512xbf16>
    %44 = arith.extf %43 : vector<16x512xbf16> to vector<16x512xf32>
    %45 = arith.truncf %33 : vector<16x128xf32> to vector<16x128xbf16>
    %cst_21 = arith.constant dense<0.000000e+00> : vector<16x512xf32>
    %46 = tpu.matmul %45, %3, %cst_21 {dimension_numbers = #tpu.dot_dimension_numbers<[1], [0], [0], [1], [0, 0, 1, 1], [], []>} : vector<16x128xbf16>, vector<128x512xbf16>, vector<16x512xf32> -> vector<16x512xf32>
    %47 = arith.addf %44, %46 : vector<16x512xf32>
    %48 = vector.extract_strided_slice %47 {offsets = [0, 0], sizes = [16, 384], strides = [1, 1]} : vector<16x512xf32> to vector<16x384xf32>
    %cst_22 = arith.constant 5.000000e-01 : f32
    %49 = vector.broadcast %cst_22 : f32 to vector<16x384xf32>
    %50 = arith.mulf %49, %48 : vector<16x384xf32>
    %51 = math.tanh %50 : vector<16x384xf32>
    %cst_23 = arith.constant 5.000000e-01 : f32
    %52 = vector.broadcast %cst_23 : f32 to vector<16x384xf32>
    %53 = arith.mulf %52, %51 : vector<16x384xf32>
    %cst_24 = arith.constant 5.000000e-01 : f32
    %54 = vector.broadcast %cst_24 : f32 to vector<16x384xf32>
    %55 = arith.addf %53, %54 : vector<16x384xf32>
    %56 = vector.extract_strided_slice %55 {offsets = [0, 0], sizes = [16, 128], strides = [1, 1]} : vector<16x384xf32> to vector<16x128xf32>
    %57 = vector.extract_strided_slice %55 {offsets = [0, 128], sizes = [16, 128], strides = [1, 1]} : vector<16x384xf32> to vector<16x128xf32>
    %58 = vector.extract_strided_slice %55 {offsets = [0, 256], sizes = [16, 128], strides = [1, 1]} : vector<16x384xf32> to vector<16x128xf32>
    %59 = vector.extract_strided_slice %47 {offsets = [0, 384], sizes = [16, 128], strides = [1, 1]} : vector<16x512xf32> to vector<16x128xf32>
    %60 = math.tanh %59 : vector<16x128xf32>
    %61 = arith.mulf %57, %31 : vector<16x128xf32>
    %62 = arith.mulf %56, %60 : vector<16x128xf32>
    %63 = arith.addf %61, %62 : vector<16x128xf32>
    %64 = math.tanh %63 : vector<16x128xf32>
    %65 = arith.mulf %58, %64 : vector<16x128xf32>
    %66 = arith.truncf %65 : vector<16x128xf32> to vector<16x128xbf16>
    %c0_25 = arith.constant 0 : index
    %67 = arith.index_cast %40 : i32 to index
    %c0_26 = arith.constant 0 : index
    %c0_27 = arith.constant 0 : index
    %68 = vector.load %arg4[%c0_25, %67, %c0_26, %c0_27] : memref<1x8x16x128xbf16, #tpu.memory_space<vmem>>, vector<1x1x16x128xbf16>
    %69 = vector.shape_cast %68 : vector<1x1x16x128xbf16> to vector<16x128xbf16>
    %70 = vector.shape_cast %66 : vector<16x128xbf16> to vector<1x1x16x128xbf16>
    tpu.vector_store %arg4[%c0_25, %67, %c0_26, %c0_27], %70 {strides = array<i32>} : memref<1x8x16x128xbf16, #tpu.memory_space<vmem>>, vector<1x1x16x128xbf16>,
    %c2_i32 = arith.constant 2 : i32
    %c7_i32_28 = arith.constant 7 : i32
    %71 = arith.subi %c7_i32_28, %c2_i32 : i32
    %72 = arith.select %4, %71, %c2_i32 : i32
    %c0_29 = arith.constant 0 : index
    %73 = arith.index_cast %72 : i32 to index
    %c0_30 = arith.constant 0 : index
    %c0_31 = arith.constant 0 : index
    %74 = vector.load %arg2[%c0_29, %73, %c0_30, %c0_31] : memref<1x8x16x512xbf16, #tpu.memory_space<vmem>>, vector<1x1x16x512xbf16>
    %75 = vector.shape_cast %74 : vector<1x1x16x512xbf16> to vector<16x512xbf16>
    %76 = arith.extf %75 : vector<16x512xbf16> to vector<16x512xf32>
    %77 = arith.truncf %65 : vector<16x128xf32> to vector<16x128xbf16>
    %cst_32 = arith.constant dense<0.000000e+00> : vector<16x512xf32>
    %78 = tpu.matmul %77, %3, %cst_32 {dimension_numbers = #tpu.dot_dimension_numbers<[1], [0], [0], [1], [0, 0, 1, 1], [], []>} : vector<16x128xbf16>, vector<128x512xbf16>, vector<16x512xf32> -> vector<16x512xf32>
    %79 = arith.addf %76, %78 : vector<16x512xf32>
    %80 = vector.extract_strided_slice %79 {offsets = [0, 0], sizes = [16, 384], strides = [1, 1]} : vector<16x512xf32> to vector<16x384xf32>
    %cst_33 = arith.constant 5.000000e-01 : f32
    %81 = vector.broadcast %cst_33 : f32 to vector<16x384xf32>
    %82 = arith.mulf %81, %80 : vector<16x384xf32>
    %83 = math.tanh %82 : vector<16x384xf32>
    %cst_34 = arith.constant 5.000000e-01 : f32
    %84 = vector.broadcast %cst_34 : f32 to vector<16x384xf32>
    %85 = arith.mulf %84, %83 : vector<16x384xf32>
    %cst_35 = arith.constant 5.000000e-01 : f32
    %86 = vector.broadcast %cst_35 : f32 to vector<16x384xf32>
    %87 = arith.addf %85, %86 : vector<16x384xf32>
    %88 = vector.extract_strided_slice %87 {offsets = [0, 0], sizes = [16, 128], strides = [1, 1]} : vector<16x384xf32> to vector<16x128xf32>
    %89 = vector.extract_strided_slice %87 {offsets = [0, 128], sizes = [16, 128], strides = [1, 1]} : vector<16x384xf32> to vector<16x128xf32>
    %90 = vector.extract_strided_slice %87 {offsets = [0, 256], sizes = [16, 128], strides = [1, 1]} : vector<16x384xf32> to vector<16x128xf32>
    %91 = vector.extract_strided_slice %79 {offsets = [0, 384], sizes = [16, 128], strides = [1, 1]} : vector<16x512xf32> to vector<16x128xf32>
    %92 = math.tanh %91 : vector<16x128xf32>
    %93 = arith.mulf %89, %63 : vector<16x128xf32>
    %94 = arith.mulf %88, %92 : vector<16x128xf32>
    %95 = arith.addf %93, %94 : vector<16x128xf32>
    %96 = math.tanh %95 : vector<16x128xf32>
    %97 = arith.mulf %90, %96 : vector<16x128xf32>
    %98 = arith.truncf %97 : vector<16x128xf32> to vector<16x128xbf16>
    %c0_36 = arith.constant 0 : index
    %99 = arith.index_cast %72 : i32 to index
    %c0_37 = arith.constant 0 : index
    %c0_38 = arith.constant 0 : index
    %100 = vector.load %arg4[%c0_36, %99, %c0_37, %c0_38] : memref<1x8x16x128xbf16, #tpu.memory_space<vmem>>, vector<1x1x16x128xbf16>
    %101 = vector.shape_cast %100 : vector<1x1x16x128xbf16> to vector<16x128xbf16>
    %102 = vector.shape_cast %98 : vector<16x128xbf16> to vector<1x1x16x128xbf16>
    tpu.vector_store %arg4[%c0_36, %99, %c0_37, %c0_38], %102 {strides = array<i32>} : memref<1x8x16x128xbf16, #tpu.memory_space<vmem>>, vector<1x1x16x128xbf16>,
    %c3_i32 = arith.constant 3 : i32
    %c7_i32_39 = arith.constant 7 : i32
    %103 = arith.subi %c7_i32_39, %c3_i32 : i32
    %104 = arith.select %4, %103, %c3_i32 : i32
    %c0_40 = arith.constant 0 : index
    %105 = arith.index_cast %104 : i32 to index
    %c0_41 = arith.constant 0 : index
    %c0_42 = arith.constant 0 : index
    %106 = vector.load %arg2[%c0_40, %105, %c0_41, %c0_42] : memref<1x8x16x512xbf16, #tpu.memory_space<vmem>>, vector<1x1x16x512xbf16>
    %107 = vector.shape_cast %106 : vector<1x1x16x512xbf16> to vector<16x512xbf16>
    %108 = arith.extf %107 : vector<16x512xbf16> to vector<16x512xf32>
    %109 = arith.truncf %97 : vector<16x128xf32> to vector<16x128xbf16>
    %cst_43 = arith.constant dense<0.000000e+00> : vector<16x512xf32>
    %110 = tpu.matmul %109, %3, %cst_43 {dimension_numbers = #tpu.dot_dimension_numbers<[1], [0], [0], [1], [0, 0, 1, 1], [], []>} : vector<16x128xbf16>, vector<128x512xbf16>, vector<16x512xf32> -> vector<16x512xf32>
    %111 = arith.addf %108, %110 : vector<16x512xf32>
    %112 = vector.extract_strided_slice %111 {offsets = [0, 0], sizes = [16, 384], strides = [1, 1]} : vector<16x512xf32> to vector<16x384xf32>
    %cst_44 = arith.constant 5.000000e-01 : f32
    %113 = vector.broadcast %cst_44 : f32 to vector<16x384xf32>
    %114 = arith.mulf %113, %112 : vector<16x384xf32>
    %115 = math.tanh %114 : vector<16x384xf32>
    %cst_45 = arith.constant 5.000000e-01 : f32
    %116 = vector.broadcast %cst_45 : f32 to vector<16x384xf32>
    %117 = arith.mulf %116, %115 : vector<16x384xf32>
    %cst_46 = arith.constant 5.000000e-01 : f32
    %118 = vector.broadcast %cst_46 : f32 to vector<16x384xf32>
    %119 = arith.addf %117, %118 : vector<16x384xf32>
    %120 = vector.extract_strided_slice %119 {offsets = [0, 0], sizes = [16, 128], strides = [1, 1]} : vector<16x384xf32> to vector<16x128xf32>
    %121 = vector.extract_strided_slice %119 {offsets = [0, 128], sizes = [16, 128], strides = [1, 1]} : vector<16x384xf32> to vector<16x128xf32>
    %122 = vector.extract_strided_slice %119 {offsets = [0, 256], sizes = [16, 128], strides = [1, 1]} : vector<16x384xf32> to vector<16x128xf32>
    %123 = vector.extract_strided_slice %111 {offsets = [0, 384], sizes = [16, 128], strides = [1, 1]} : vector<16x512xf32> to vector<16x128xf32>
    %124 = math.tanh %123 : vector<16x128xf32>
    %125 = arith.mulf %121, %95 : vector<16x128xf32>
    %126 = arith.mulf %120, %124 : vector<16x128xf32>
    %127 = arith.addf %125, %126 : vector<16x128xf32>
    %128 = math.tanh %127 : vector<16x128xf32>
    %129 = arith.mulf %122, %128 : vector<16x128xf32>
    %130 = arith.truncf %129 : vector<16x128xf32> to vector<16x128xbf16>
    %c0_47 = arith.constant 0 : index
    %131 = arith.index_cast %104 : i32 to index
    %c0_48 = arith.constant 0 : index
    %c0_49 = arith.constant 0 : index
    %132 = vector.load %arg4[%c0_47, %131, %c0_48, %c0_49] : memref<1x8x16x128xbf16, #tpu.memory_space<vmem>>, vector<1x1x16x128xbf16>
    %133 = vector.shape_cast %132 : vector<1x1x16x128xbf16> to vector<16x128xbf16>
    %134 = vector.shape_cast %130 : vector<16x128xbf16> to vector<1x1x16x128xbf16>
    tpu.vector_store %arg4[%c0_47, %131, %c0_48, %c0_49], %134 {strides = array<i32>} : memref<1x8x16x128xbf16, #tpu.memory_space<vmem>>, vector<1x1x16x128xbf16>,
    %c4_i32 = arith.constant 4 : i32
    %c7_i32_50 = arith.constant 7 : i32
    %135 = arith.subi %c7_i32_50, %c4_i32 : i32
    %136 = arith.select %4, %135, %c4_i32 : i32
    %c0_51 = arith.constant 0 : index
    %137 = arith.index_cast %136 : i32 to index
    %c0_52 = arith.constant 0 : index
    %c0_53 = arith.constant 0 : index
    %138 = vector.load %arg2[%c0_51, %137, %c0_52, %c0_53] : memref<1x8x16x512xbf16, #tpu.memory_space<vmem>>, vector<1x1x16x512xbf16>
    %139 = vector.shape_cast %138 : vector<1x1x16x512xbf16> to vector<16x512xbf16>
    %140 = arith.extf %139 : vector<16x512xbf16> to vector<16x512xf32>
    %141 = arith.truncf %129 : vector<16x128xf32> to vector<16x128xbf16>
    %cst_54 = arith.constant dense<0.000000e+00> : vector<16x512xf32>
    %142 = tpu.matmul %141, %3, %cst_54 {dimension_numbers = #tpu.dot_dimension_numbers<[1], [0], [0], [1], [0, 0, 1, 1], [], []>} : vector<16x128xbf16>, vector<128x512xbf16>, vector<16x512xf32> -> vector<16x512xf32>
    %143 = arith.addf %140, %142 : vector<16x512xf32>
    %144 = vector.extract_strided_slice %143 {offsets = [0, 0], sizes = [16, 384], strides = [1, 1]} : vector<16x512xf32> to vector<16x384xf32>
    %cst_55 = arith.constant 5.000000e-01 : f32
    %145 = vector.broadcast %cst_55 : f32 to vector<16x384xf32>
    %146 = arith.mulf %145, %144 : vector<16x384xf32>
    %147 = math.tanh %146 : vector<16x384xf32>
    %cst_56 = arith.constant 5.000000e-01 : f32
    %148 = vector.broadcast %cst_56 : f32 to vector<16x384xf32>
    %149 = arith.mulf %148, %147 : vector<16x384xf32>
    %cst_57 = arith.constant 5.000000e-01 : f32
    %150 = vector.broadcast %cst_57 : f32 to vector<16x384xf32>
    %151 = arith.addf %149, %150 : vector<16x384xf32>
    %152 = vector.extract_strided_slice %151 {offsets = [0, 0], sizes = [16, 128], strides = [1, 1]} : vector<16x384xf32> to vector<16x128xf32>
    %153 = vector.extract_strided_slice %151 {offsets = [0, 128], sizes = [16, 128], strides = [1, 1]} : vector<16x384xf32> to vector<16x128xf32>
    %154 = vector.extract_strided_slice %151 {offsets = [0, 256], sizes = [16, 128], strides = [1, 1]} : vector<16x384xf32> to vector<16x128xf32>
    %155 = vector.extract_strided_slice %143 {offsets = [0, 384], sizes = [16, 128], strides = [1, 1]} : vector<16x512xf32> to vector<16x128xf32>
    %156 = math.tanh %155 : vector<16x128xf32>
    %157 = arith.mulf %153, %127 : vector<16x128xf32>
    %158 = arith.mulf %152, %156 : vector<16x128xf32>
    %159 = arith.addf %157, %158 : vector<16x128xf32>
    %160 = math.tanh %159 : vector<16x128xf32>
    %161 = arith.mulf %154, %160 : vector<16x128xf32>
    %162 = arith.truncf %161 : vector<16x128xf32> to vector<16x128xbf16>
    %c0_58 = arith.constant 0 : index
    %163 = arith.index_cast %136 : i32 to index
    %c0_59 = arith.constant 0 : index
    %c0_60 = arith.constant 0 : index
    %164 = vector.load %arg4[%c0_58, %163, %c0_59, %c0_60] : memref<1x8x16x128xbf16, #tpu.memory_space<vmem>>, vector<1x1x16x128xbf16>
    %165 = vector.shape_cast %164 : vector<1x1x16x128xbf16> to vector<16x128xbf16>
    %166 = vector.shape_cast %162 : vector<16x128xbf16> to vector<1x1x16x128xbf16>
    tpu.vector_store %arg4[%c0_58, %163, %c0_59, %c0_60], %166 {strides = array<i32>} : memref<1x8x16x128xbf16, #tpu.memory_space<vmem>>, vector<1x1x16x128xbf16>,
    %c5_i32 = arith.constant 5 : i32
    %c7_i32_61 = arith.constant 7 : i32
    %167 = arith.subi %c7_i32_61, %c5_i32 : i32
    %168 = arith.select %4, %167, %c5_i32 : i32
    %c0_62 = arith.constant 0 : index
    %169 = arith.index_cast %168 : i32 to index
    %c0_63 = arith.constant 0 : index
    %c0_64 = arith.constant 0 : index
    %170 = vector.load %arg2[%c0_62, %169, %c0_63, %c0_64] : memref<1x8x16x512xbf16, #tpu.memory_space<vmem>>, vector<1x1x16x512xbf16>
    %171 = vector.shape_cast %170 : vector<1x1x16x512xbf16> to vector<16x512xbf16>
    %172 = arith.extf %171 : vector<16x512xbf16> to vector<16x512xf32>
    %173 = arith.truncf %161 : vector<16x128xf32> to vector<16x128xbf16>
    %cst_65 = arith.constant dense<0.000000e+00> : vector<16x512xf32>
    %174 = tpu.matmul %173, %3, %cst_65 {dimension_numbers = #tpu.dot_dimension_numbers<[1], [0], [0], [1], [0, 0, 1, 1], [], []>} : vector<16x128xbf16>, vector<128x512xbf16>, vector<16x512xf32> -> vector<16x512xf32>
    %175 = arith.addf %172, %174 : vector<16x512xf32>
    %176 = vector.extract_strided_slice %175 {offsets = [0, 0], sizes = [16, 384], strides = [1, 1]} : vector<16x512xf32> to vector<16x384xf32>
    %cst_66 = arith.constant 5.000000e-01 : f32
    %177 = vector.broadcast %cst_66 : f32 to vector<16x384xf32>
    %178 = arith.mulf %177, %176 : vector<16x384xf32>
    %179 = math.tanh %178 : vector<16x384xf32>
    %cst_67 = arith.constant 5.000000e-01 : f32
    %180 = vector.broadcast %cst_67 : f32 to vector<16x384xf32>
    %181 = arith.mulf %180, %179 : vector<16x384xf32>
    %cst_68 = arith.constant 5.000000e-01 : f32
    %182 = vector.broadcast %cst_68 : f32 to vector<16x384xf32>
    %183 = arith.addf %181, %182 : vector<16x384xf32>
    %184 = vector.extract_strided_slice %183 {offsets = [0, 0], sizes = [16, 128], strides = [1, 1]} : vector<16x384xf32> to vector<16x128xf32>
    %185 = vector.extract_strided_slice %183 {offsets = [0, 128], sizes = [16, 128], strides = [1, 1]} : vector<16x384xf32> to vector<16x128xf32>
    %186 = vector.extract_strided_slice %183 {offsets = [0, 256], sizes = [16, 128], strides = [1, 1]} : vector<16x384xf32> to vector<16x128xf32>
    %187 = vector.extract_strided_slice %175 {offsets = [0, 384], sizes = [16, 128], strides = [1, 1]} : vector<16x512xf32> to vector<16x128xf32>
    %188 = math.tanh %187 : vector<16x128xf32>
    %189 = arith.mulf %185, %159 : vector<16x128xf32>
    %190 = arith.mulf %184, %188 : vector<16x128xf32>
    %191 = arith.addf %189, %190 : vector<16x128xf32>
    %192 = math.tanh %191 : vector<16x128xf32>
    %193 = arith.mulf %186, %192 : vector<16x128xf32>
    %194 = arith.truncf %193 : vector<16x128xf32> to vector<16x128xbf16>
    %c0_69 = arith.constant 0 : index
    %195 = arith.index_cast %168 : i32 to index
    %c0_70 = arith.constant 0 : index
    %c0_71 = arith.constant 0 : index
    %196 = vector.load %arg4[%c0_69, %195, %c0_70, %c0_71] : memref<1x8x16x128xbf16, #tpu.memory_space<vmem>>, vector<1x1x16x128xbf16>
    %197 = vector.shape_cast %196 : vector<1x1x16x128xbf16> to vector<16x128xbf16>
    %198 = vector.shape_cast %194 : vector<16x128xbf16> to vector<1x1x16x128xbf16>
    tpu.vector_store %arg4[%c0_69, %195, %c0_70, %c0_71], %198 {strides = array<i32>} : memref<1x8x16x128xbf16, #tpu.memory_space<vmem>>, vector<1x1x16x128xbf16>,
    %c6_i32 = arith.constant 6 : i32
    %c7_i32_72 = arith.constant 7 : i32
    %199 = arith.subi %c7_i32_72, %c6_i32 : i32
    %200 = arith.select %4, %199, %c6_i32 : i32
    %c0_73 = arith.constant 0 : index
    %201 = arith.index_cast %200 : i32 to index
    %c0_74 = arith.constant 0 : index
    %c0_75 = arith.constant 0 : index
    %202 = vector.load %arg2[%c0_73, %201, %c0_74, %c0_75] : memref<1x8x16x512xbf16, #tpu.memory_space<vmem>>, vector<1x1x16x512xbf16>
    %203 = vector.shape_cast %202 : vector<1x1x16x512xbf16> to vector<16x512xbf16>
    %204 = arith.extf %203 : vector<16x512xbf16> to vector<16x512xf32>
    %205 = arith.truncf %193 : vector<16x128xf32> to vector<16x128xbf16>
    %cst_76 = arith.constant dense<0.000000e+00> : vector<16x512xf32>
    %206 = tpu.matmul %205, %3, %cst_76 {dimension_numbers = #tpu.dot_dimension_numbers<[1], [0], [0], [1], [0, 0, 1, 1], [], []>} : vector<16x128xbf16>, vector<128x512xbf16>, vector<16x512xf32> -> vector<16x512xf32>
    %207 = arith.addf %204, %206 : vector<16x512xf32>
    %208 = vector.extract_strided_slice %207 {offsets = [0, 0], sizes = [16, 384], strides = [1, 1]} : vector<16x512xf32> to vector<16x384xf32>
    %cst_77 = arith.constant 5.000000e-01 : f32
    %209 = vector.broadcast %cst_77 : f32 to vector<16x384xf32>
    %210 = arith.mulf %209, %208 : vector<16x384xf32>
    %211 = math.tanh %210 : vector<16x384xf32>
    %cst_78 = arith.constant 5.000000e-01 : f32
    %212 = vector.broadcast %cst_78 : f32 to vector<16x384xf32>
    %213 = arith.mulf %212, %211 : vector<16x384xf32>
    %cst_79 = arith.constant 5.000000e-01 : f32
    %214 = vector.broadcast %cst_79 : f32 to vector<16x384xf32>
    %215 = arith.addf %213, %214 : vector<16x384xf32>
    %216 = vector.extract_strided_slice %215 {offsets = [0, 0], sizes = [16, 128], strides = [1, 1]} : vector<16x384xf32> to vector<16x128xf32>
    %217 = vector.extract_strided_slice %215 {offsets = [0, 128], sizes = [16, 128], strides = [1, 1]} : vector<16x384xf32> to vector<16x128xf32>
    %218 = vector.extract_strided_slice %215 {offsets = [0, 256], sizes = [16, 128], strides = [1, 1]} : vector<16x384xf32> to vector<16x128xf32>
    %219 = vector.extract_strided_slice %207 {offsets = [0, 384], sizes = [16, 128], strides = [1, 1]} : vector<16x512xf32> to vector<16x128xf32>
    %220 = math.tanh %219 : vector<16x128xf32>
    %221 = arith.mulf %217, %191 : vector<16x128xf32>
    %222 = arith.mulf %216, %220 : vector<16x128xf32>
    %223 = arith.addf %221, %222 : vector<16x128xf32>
    %224 = math.tanh %223 : vector<16x128xf32>
    %225 = arith.mulf %218, %224 : vector<16x128xf32>
    %226 = arith.truncf %225 : vector<16x128xf32> to vector<16x128xbf16>
    %c0_80 = arith.constant 0 : index
    %227 = arith.index_cast %200 : i32 to index
    %c0_81 = arith.constant 0 : index
    %c0_82 = arith.constant 0 : index
    %228 = vector.load %arg4[%c0_80, %227, %c0_81, %c0_82] : memref<1x8x16x128xbf16, #tpu.memory_space<vmem>>, vector<1x1x16x128xbf16>
    %229 = vector.shape_cast %228 : vector<1x1x16x128xbf16> to vector<16x128xbf16>
    %230 = vector.shape_cast %226 : vector<16x128xbf16> to vector<1x1x16x128xbf16>
    tpu.vector_store %arg4[%c0_80, %227, %c0_81, %c0_82], %230 {strides = array<i32>} : memref<1x8x16x128xbf16, #tpu.memory_space<vmem>>, vector<1x1x16x128xbf16>,
    %c7_i32_83 = arith.constant 7 : i32
    %c7_i32_84 = arith.constant 7 : i32
    %231 = arith.subi %c7_i32_84, %c7_i32_83 : i32
    %232 = arith.select %4, %231, %c7_i32_83 : i32
    %c0_85 = arith.constant 0 : index
    %233 = arith.index_cast %232 : i32 to index
    %c0_86 = arith.constant 0 : index
    %c0_87 = arith.constant 0 : index
    %234 = vector.load %arg2[%c0_85, %233, %c0_86, %c0_87] : memref<1x8x16x512xbf16, #tpu.memory_space<vmem>>, vector<1x1x16x512xbf16>
    %235 = vector.shape_cast %234 : vector<1x1x16x512xbf16> to vector<16x512xbf16>
    %236 = arith.extf %235 : vector<16x512xbf16> to vector<16x512xf32>
    %237 = arith.truncf %225 : vector<16x128xf32> to vector<16x128xbf16>
    %cst_88 = arith.constant dense<0.000000e+00> : vector<16x512xf32>
    %238 = tpu.matmul %237, %3, %cst_88 {dimension_numbers = #tpu.dot_dimension_numbers<[1], [0], [0], [1], [0, 0, 1, 1], [], []>} : vector<16x128xbf16>, vector<128x512xbf16>, vector<16x512xf32> -> vector<16x512xf32>
    %239 = arith.addf %236, %238 : vector<16x512xf32>
    %240 = vector.extract_strided_slice %239 {offsets = [0, 0], sizes = [16, 384], strides = [1, 1]} : vector<16x512xf32> to vector<16x384xf32>
    %cst_89 = arith.constant 5.000000e-01 : f32
    %241 = vector.broadcast %cst_89 : f32 to vector<16x384xf32>
    %242 = arith.mulf %241, %240 : vector<16x384xf32>
    %243 = math.tanh %242 : vector<16x384xf32>
    %cst_90 = arith.constant 5.000000e-01 : f32
    %244 = vector.broadcast %cst_90 : f32 to vector<16x384xf32>
    %245 = arith.mulf %244, %243 : vector<16x384xf32>
    %cst_91 = arith.constant 5.000000e-01 : f32
    %246 = vector.broadcast %cst_91 : f32 to vector<16x384xf32>
    %247 = arith.addf %245, %246 : vector<16x384xf32>
    %248 = vector.extract_strided_slice %247 {offsets = [0, 0], sizes = [16, 128], strides = [1, 1]} : vector<16x384xf32> to vector<16x128xf32>
    %249 = vector.extract_strided_slice %247 {offsets = [0, 128], sizes = [16, 128], strides = [1, 1]} : vector<16x384xf32> to vector<16x128xf32>
    %250 = vector.extract_strided_slice %247 {offsets = [0, 256], sizes = [16, 128], strides = [1, 1]} : vector<16x384xf32> to vector<16x128xf32>
    %251 = vector.extract_strided_slice %239 {offsets = [0, 384], sizes = [16, 128], strides = [1, 1]} : vector<16x512xf32> to vector<16x128xf32>
    %252 = math.tanh %251 : vector<16x128xf32>
    %253 = arith.mulf %249, %223 : vector<16x128xf32>
    %254 = arith.mulf %248, %252 : vector<16x128xf32>
    %255 = arith.addf %253, %254 : vector<16x128xf32>
    %256 = math.tanh %255 : vector<16x128xf32>
    %257 = arith.mulf %250, %256 : vector<16x128xf32>
    %258 = arith.truncf %257 : vector<16x128xf32> to vector<16x128xbf16>
    %c0_92 = arith.constant 0 : index
    %259 = arith.index_cast %232 : i32 to index
    %c0_93 = arith.constant 0 : index
    %c0_94 = arith.constant 0 : index
    %260 = vector.load %arg4[%c0_92, %259, %c0_93, %c0_94] : memref<1x8x16x128xbf16, #tpu.memory_space<vmem>>, vector<1x1x16x128xbf16>
    %261 = vector.shape_cast %260 : vector<1x1x16x128xbf16> to vector<16x128xbf16>
    %262 = vector.shape_cast %258 : vector<16x128xbf16> to vector<1x1x16x128xbf16>
    tpu.vector_store %arg4[%c0_92, %259, %c0_93, %c0_94], %262 {strides = array<i32>} : memref<1x8x16x128xbf16, #tpu.memory_space<vmem>>, vector<1x1x16x128xbf16>,
    %c8_i32 = arith.constant 8 : i32
    %c0_95 = arith.constant 0 : index
    %c0_96 = arith.constant 0 : index
    %263 = vector.load %arg6[%c0_95, %c0_96] : memref<16x128xf32, #tpu.memory_space<vmem>>, vector<16x128xf32>
    tpu.vector_store %arg6[%c0_95, %c0_96], %257 {strides = array<i32>} : memref<16x128xf32, #tpu.memory_space<vmem>>, vector<16x128xf32>,
    %c0_97 = arith.constant 0 : index
    %c0_98 = arith.constant 0 : index
    %264 = vector.load %arg7[%c0_97, %c0_98] : memref<16x128xf32, #tpu.memory_space<vmem>>, vector<16x128xf32>
    tpu.vector_store %arg7[%c0_97, %c0_98], %255 {strides = array<i32>} : memref<16x128xf32, #tpu.memory_space<vmem>>, vector<16x128xf32>,
    return
  }
  func.func @transform_0(%arg0: i32, %arg1: i32) -> (i32, i32, i32, i32) {
    %c1_i32 = arith.constant 1 : i32
    %0 = arith.subi %c1_i32, %arg0 : i32
    %1 = arith.muli %0, %arg1 : i32
    %c0_i32 = arith.constant 0 : i32
    %2 = arith.subi %c0_i32, %arg1 : i32
    %3 = arith.muli %arg0, %2 : i32
    %4 = arith.addi %1, %3 : i32
    %c0_i32_0 = arith.constant 0 : i32
    %c0_i32_1 = arith.constant 0 : i32
    %c0_i32_2 = arith.constant 0 : i32
    return %arg0, %4, %c0_i32_0, %c0_i32_1 : i32, i32, i32, i32
  }
  func.func @transform_2(%arg0: i32, %arg1: i32) -> (i32, i32, i32, i32) {
    %c1_i32 = arith.constant 1 : i32
    %0 = arith.subi %c1_i32, %arg0 : i32
    %1 = arith.muli %0, %arg1 : i32
    %c0_i32 = arith.constant 0 : i32
    %2 = arith.subi %c0_i32, %arg1 : i32
    %3 = arith.muli %arg0, %2 : i32
    %4 = arith.addi %1, %3 : i32
    %c0_i32_0 = arith.constant 0 : i32
    %c0_i32_1 = arith.constant 0 : i32
    %c0_i32_2 = arith.constant 0 : i32
    return %arg0, %4, %c0_i32_0, %c0_i32_1 : i32, i32, i32, i32
  }
}

</mosaic_0001>

<llo_original>
// kernel: tpu_custom_call.1
$region0: #{tpu_custom_call.1}
  #allocation0 [shape = 'u32[]', space=smem, size = 0x4, offset = 0x4, fixed_abs, tag = 'smem constant byte address 0x4 - core index']
  #allocation1 [shape = 'u32[144,128]{1,0:T(1,128)}', space=vmem, size = 0x12000, scoped, tag = 'internal scratch']
  #allocation2 [shape = 'bf16[128,512]{1,0:T(16,128)(2,1)}', space=vmem, size = 0x20000, scoped, tag = 'scratch operand']
  #allocation3 [shape = 'f32[16,128]{1,0:T(8,128)}', space=vmem, size = 0x2000, scoped, tag = 'scratch operand']
  #allocation4 [shape = 'f32[16,128]{1,0:T(8,128)}', space=vmem, size = 0x2000, scoped, tag = 'scratch operand']
  #allocation5 [shape = 's32[1]{0}', space=sflag, size = 0x4, scoped, tag = 'scratch operand']
  #allocation10 [shape = 's32[]', space=sflag, size = 0x4, offset = 0, fixed_abs, tag = 'sflag constant byte address 0x0 - dummy sync flag']
  %s0 = inlined_call_operand.hbm [shape: bf16[1,8,16,512], index: 0, kind: input, shape index: {}]
  %s1 = inlined_call_operand.hbm [shape: bf16[1,128,512], index: 1, kind: input, shape index: {}]
  %s2 = inlined_call_operand.hbm [shape: bf16[1,8,16,128], index: 2, kind: output, shape index: {}]
  %s3 = sld [smem:[#allocation0]]
  $region22: #{tpu_custom_call.1} parent=0
    _
  %s5 = ssub.s32 1, %s3
  %s6 = scalar_select 0, %s5, %s3
  $region1: #{tpu_custom_call.1} parent=0
    #allocation6 [shape = 'u8[131072]{0}', space=vmem, size = 0x20000, scoped, tag = 'input window, operand 0, single buffered']
    #allocation7 [shape = 's32[1]{0}', space=sflag, size = 0x4, scoped, tag = 'scoped memory for tpu_custom_call.1']
    #allocation8 [shape = 's32[1]{0}', space=sflag, size = 0x4, scoped, tag = 'scoped memory for tpu_custom_call.1']
    #allocation9 [shape = 'u8[32768]{0}', space=vmem, size = 0x8000, scoped, tag = 'output window, operand 0, single buffered']
    %7 = vsyncpa [#allocation7], 0
    %8 = vsyncpa [#allocation8], 0
    // Predicated region
    $region2: #{tpu_custom_call.1} parent=1 // pred_check
      _
    $region3: #{tpu_custom_call.1} parent=1 // pred_check_branch
      %10 = sbr.rel (0) target = $region5
    $region4: #{tpu_custom_call.1} parent=1 // pred_region
      %s11 = ssub.s32 1, 0
      %s12 = smul.u32 %s11, 0
      %s13 = ssub.s32 0, 0
      %s14 = smul.u32 0, %s13
      %s15 = sadd.s32 %s12, %s14
      %s16 = smul.u32 8, %s15
      %s18 = ssub.s32 4096, 4096
      %19 = vsyncadd [#allocation7], %s18
      %s20 = smul.addr %s16, 8
      %s21 = smul.addr %s20, 64
      %s22 = scalar_lea.hbm %s0, %s21
      %s23 = sshll.u32 [#allocation6], 4
      %s24 = int_to_ptr.vmem [resolvable:$true] %s23
      %29 = dma.hbm_to_vmem [thread:$0]  %s22, 4096, %s24, [#allocation7], 256, 256, 16
    $region5: #{tpu_custom_call.1} parent=1 // pred_fallthru
      _
    // Predicated region
    $region6: #{tpu_custom_call.1} parent=1 // pred_check
      _
    $region7: #{tpu_custom_call.1} parent=1 // pred_check_branch
      %31 = sbr.rel (0) target = $region9
    $region8: #{tpu_custom_call.1} parent=1 // pred_region
      %32 = dma.done [#allocation7], 4096
    $region9: #{tpu_custom_call.1} parent=1 // pred_fallthru
      _
    %s33 = ssub.s32 1, 0
    %s34 = smul.u32 %s33, 0
    %s35 = ssub.s32 0, 0
    %s36 = smul.u32 0, %s35
    %s37 = sadd.s32 %s34, %s36
    %s38 = smul.u32 8, %s37
    %s39 = ssub.s32 1, 0
    %s40 = smul.u32 %s39, 0
    %s41 = ssub.s32 0, 0
    %s42 = smul.u32 0, %s41
    %s43 = sadd.s32 %s40, %s42
    %s44 = smul.u32 8, %s43
    %p46 = scmp.eq.s32.totalorder 0, 0
    // Predicated region
    $region10: #{tpu_custom_call.1} parent=1 // pred_check
      %p47 = pneg %p46
    $region11: #{tpu_custom_call.1} parent=1 // pred_check_branch
      %49 = sbr.rel (%p47) target = $region13
    $region12: #{tpu_custom_call.1} parent=1 // pred_region
      #allocation11 [shape = 'u32[9]{0}', space=smem, size = 0x24, scoped, tag = 'DMA stride descriptor']
      %50 = vst [vmem:[#allocation3] sm:$0xff] 0.0
      %51 = vst [vmem:[#allocation3 + $0x8] sm:$0xff] 0.0
      %52 = vst [vmem:[#allocation4] sm:$0xff] 0.0
      %53 = vst [vmem:[#allocation4 + $0x8] sm:$0xff] 0.0
      %s54 = smul.u32 0, 64
      %s55 = smul.addr %s54, 64
      %s56 = scalar_lea.hbm %s1, %s55
      %s58 = sshll.u32 1, 14
      %s59 = sxor.u32 4294967295, %s58
      %s61 = sld [smem:[#allocation0]]
      %s62 = sadd.s32 2, %s61
      %s64 = sshll.u32 7, 26
      %s65 = sxor.u32 4294967295, %s64
      %s66 = sand.u32 0, %s65
      %s67 = sshll.u32 %s62, 26
      %s68 = sor.u32 %s66, %s67
      %s69 = sshll.u32 [#allocation2], 4
      %s70 = int_to_ptr.vmem [resolvable:$true] %s69
      %73 = sst [smem:[#allocation11]] 512
      %s74 = scalar_lea.smem [#allocation11], 1
      %75 = sst [smem:[%s74]] 512
      %s76 = scalar_lea.smem [#allocation11], 2
      %77 = sst [smem:[%s76]] 4
      %s78 = scalar_lea.smem [#allocation11], 3
      %79 = sst [smem:[%s78]] 64
      %s80 = scalar_lea.smem [#allocation11], 4
      %81 = sst [smem:[%s80]] 128
      %s82 = scalar_lea.smem [#allocation11], 5
      %83 = sst [smem:[%s82]] 2
      %s84 = scalar_lea.smem [#allocation11], 6
      %85 = sst [smem:[%s84]] 256
      %s86 = scalar_lea.smem [#allocation11], 7
      %87 = sst [smem:[%s86]] 64
      %s88 = scalar_lea.smem [#allocation11], 8
      %89 = sst [smem:[%s88]] 4
      %91 = dma.general %s56, 4096, %s70, [#allocation5], [#allocation10], [#allocation11], %s68, 0
      %s92 = smul.u32 4, 16
      %s93 = smul.u32 %s92, 4
      %s94 = sshll.u32 %s93, 4
      %95 = dma.done [#allocation5], %s94
    $region13: #{tpu_custom_call.1} parent=1 // pred_fallthru
      _
    %v96 = vld [vmem:[#allocation2] sm:$0xff]
    %v97 = vld [vmem:[#allocation2 + $0x8] sm:$0xff]
    %v98 = vld [vmem:[#allocation2 + $0x10] sm:$0xff]
    %v99 = vld [vmem:[#allocation2 + $0x18] sm:$0xff]
    %v100 = vld [vmem:[#allocation2 + $0x20] sm:$0xff]
    %v101 = vld [vmem:[#allocation2 + $0x28] sm:$0xff]
    %v102 = vld [vmem:[#allocation2 + $0x30] sm:$0xff]
    %v103 = vld [vmem:[#allocation2 + $0x38] sm:$0xff]
    %v104 = vld [vmem:[#allocation2 + $0x40] sm:$0xff]
    %v105 = vld [vmem:[#allocation2 + $0x48] sm:$0xff]
    %v106 = vld [vmem:[#allocation2 + $0x50] sm:$0xff]
    %v107 = vld [vmem:[#allocation2 + $0x58] sm:$0xff]
    %v108 = vld [vmem:[#allocation2 + $0x60] sm:$0xff]
    %v109 = vld [vmem:[#allocation2 + $0x68] sm:$0xff]
    %v110 = vld [vmem:[#allocation2 + $0x70] sm:$0xff]
    %v111 = vld [vmem:[#allocation2 + $0x78] sm:$0xff]
    %v112 = vld [vmem:[#allocation2 + $0x80] sm:$0xff]
    %v113 = vld [vmem:[#allocation2 + $0x88] sm:$0xff]
    %v114 = vld [vmem:[#allocation2 + $0x90] sm:$0xff]
    %v115 = vld [vmem:[#allocation2 + $0x98] sm:$0xff]
    %v116 = vld [vmem:[#allocation2 + $0xa0] sm:$0xff]
    %v117 = vld [vmem:[#allocation2 + $0xa8] sm:$0xff]
    %v118 = vld [vmem:[#allocation2 + $0xb0] sm:$0xff]
    %v119 = vld [vmem:[#allocation2 + $0xb8] sm:$0xff]
    %v120 = vld [vmem:[#allocation2 + $0xc0] sm:$0xff]
    %v121 = vld [vmem:[#allocation2 + $0xc8] sm:$0xff]
    %v122 = vld [vmem:[#allocation2 + $0xd0] sm:$0xff]
    %v123 = vld [vmem:[#allocation2 + $0xd8] sm:$0xff]
    %v124 = vld [vmem:[#allocation2 + $0xe0] sm:$0xff]
    %v125 = vld [vmem:[#allocation2 + $0xe8] sm:$0xff]
    %v126 = vld [vmem:[#allocation2 + $0xf0] sm:$0xff]
    %v127 = vld [vmem:[#allocation2 + $0xf8] sm:$0xff]
    %p128 = scmp.eq.s32.totalorder 0, 1
    %v129 = vld [vmem:[#allocation3] sm:$0xff]
    %v130 = vld [vmem:[#allocation3 + $0x8] sm:$0xff]
    %v131 = vld [vmem:[#allocation4] sm:$0xff]
    %v132 = vld [vmem:[#allocation4 + $0x8] sm:$0xff]
    %s133 = scalar_select %p128, 7, 0
    %s134 = smul.u32 %s133, 8
    %s135 = smul.addr %s134, 4
    %s136 = scalar_lea.vmem [#allocation6], %s135
    %v137 = vld [vmem:[%s136] sm:$0xff]
    %v138 = vld [vmem:[%s136 + $0x8] sm:$0xff]
    %v139 = vld [vmem:[%s136 + $0x10] sm:$0xff]
    %v140 = vld [vmem:[%s136 + $0x18] sm:$0xff]
    %v141 = vunpack.c.l.bf16 %v137
    %v142 = vunpack.c.h.bf16 %v137
    %v143 = vunpack.c.l.bf16 %v138
    %v144 = vunpack.c.h.bf16 %v138
    %v145 = vunpack.c.l.bf16 %v139
    %v146 = vunpack.c.h.bf16 %v139
    %v147 = vunpack.c.l.bf16 %v140
    %v148 = vunpack.c.h.bf16 %v140
    %v149 = vpack.c.bf16 %v130, %v129
    %150 = vmatprep.subr.bf16.mxu0 %v97
    %151 = vmatpush1.bf16.msra.mxu0 %v96
    %152 = vmatprep.subr.bf16.mxu0 %v101
    %153 = vmatpush1.bf16.msra.mxu0 %v100
    %154 = vmatprep.subr.bf16.mxu0 %v105
    %155 = vmatpush1.bf16.msra.mxu0 %v104
    %156 = vmatprep.subr.bf16.mxu0 %v109
    %157 = vmatpush1.bf16.msra.mxu0 %v108
    %158 = vmatprep.subr.bf16.mxu0 %v113
    %159 = vmatpush1.bf16.msra.mxu0 %v112
    %160 = vmatprep.subr.bf16.mxu0 %v117
    %161 = vmatpush1.bf16.msra.mxu0 %v116
    %162 = vmatprep.subr.bf16.mxu0 %v121
    %163 = vmatpush1.bf16.msra.mxu0 %v120
    %164 = vmatprep.subr.bf16.mxu0 %v125
    %165 = vmatpush1.bf16.msra.mxu0 %v124
    %166 = vmatprep.subr.bf16.mxu0 0
    %167 = vmatpush1.bf16.msra.mxu0 0
    %168 = vmatprep.subr.bf16.mxu0 0
    %169 = vmatpush1.bf16.msra.mxu0 0
    %170 = vmatprep.subr.bf16.mxu0 0
    %171 = vmatpush1.bf16.msra.mxu0 0
    %172 = vmatprep.subr.bf16.mxu0 0
    %173 = vmatpush1.bf16.msra.mxu0 0
    %174 = vmatprep.subr.bf16.mxu0 0
    %175 = vmatpush1.bf16.msra.mxu0 0
    %176 = vmatprep.subr.bf16.mxu0 0
    %177 = vmatpush1.bf16.msra.mxu0 0
    %178 = vmatprep.subr.bf16.mxu0 0
    %179 = vmatpush1.bf16.msra.mxu0 0
    %180 = vmatprep.subr.bf16.mxu0 0
    %181 = vmatpush1.bf16.msra.mxu0 0
    %182 = vmatprep.mubr.bf16.mxu0 0
    %183 = vmatmul.mubr.bf16.gmra.mrb[0].mxu0 %v149
    %v184 = vpop.f32.mrb[0].mxu0
    %v185 = vadd.f32 0.0, %v184
    %v186 = vpop.f32.mrb[0].mxu0
    %v187 = vadd.f32 0.0, %v186
    %v188 = vpop.f32.mrb[0].mxu0
    %v189 = vadd.f32 0.0, %v188
    %v190 = vpop.f32.mrb[0].mxu0
    %v191 = vadd.f32 0.0, %v190
    %192 = vdwg.mxu0
    %193 = vmatprep.subr.bf16.mxu0 %v99
    %194 = vmatpush1.bf16.msra.mxu0 %v98
    %195 = vmatprep.subr.bf16.mxu0 %v103
    %196 = vmatpush1.bf16.msra.mxu0 %v102
    %197 = vmatprep.subr.bf16.mxu0 %v107
    %198 = vmatpush1.bf16.msra.mxu0 %v106
    %199 = vmatprep.subr.bf16.mxu0 %v111
    %200 = vmatpush1.bf16.msra.mxu0 %v110
    %201 = vmatprep.subr.bf16.mxu0 %v115
    %202 = vmatpush1.bf16.msra.mxu0 %v114
    %203 = vmatprep.subr.bf16.mxu0 %v119
    %204 = vmatpush1.bf16.msra.mxu0 %v118
    %205 = vmatprep.subr.bf16.mxu0 %v123
    %206 = vmatpush1.bf16.msra.mxu0 %v122
    %207 = vmatprep.subr.bf16.mxu0 %v127
    %208 = vmatpush1.bf16.msra.mxu0 %v126
    %209 = vmatprep.subr.bf16.mxu0 0
    %210 = vmatpush1.bf16.msra.mxu0 0
    %211 = vmatprep.subr.bf16.mxu0 0
    %212 = vmatpush1.bf16.msra.mxu0 0
    %213 = vmatprep.subr.bf16.mxu0 0
    %214 = vmatpush1.bf16.msra.mxu0 0
    %215 = vmatprep.subr.bf16.mxu0 0
    %216 = vmatpush1.bf16.msra.mxu0 0
    %217 = vmatprep.subr.bf16.mxu0 0
    %218 = vmatpush1.bf16.msra.mxu0 0
    %219 = vmatprep.subr.bf16.mxu0 0
    %220 = vmatpush1.bf16.msra.mxu0 0
    %221 = vmatprep.subr.bf16.mxu0 0
    %222 = vmatpush1.bf16.msra.mxu0 0
    %223 = vmatprep.subr.bf16.mxu0 0
    %224 = vmatpush1.bf16.msra.mxu0 0
    %225 = vmatprep.mubr.bf16.mxu0 0
    %226 = vmatmul.mubr.bf16.gmra.mrb[0].mxu0 %v149
    %v227 = vpop.f32.mrb[0].mxu0
    %v228 = vadd.f32 0.0, %v227
    %v229 = vpop.f32.mrb[0].mxu0
    %v230 = vadd.f32 0.0, %v229
    %v231 = vpop.f32.mrb[0].mxu0
    %v232 = vadd.f32 0.0, %v231
    %v233 = vpop.f32.mrb[0].mxu0
    %v234 = vadd.f32 0.0, %v233
    %235 = vdwg.mxu0
    %v236 = vadd.f32 %v141, %v185
    %v237 = vadd.f32 %v142, %v187
    %v238 = vadd.f32 %v143, %v228
    %v239 = vadd.f32 %v144, %v230
    %v240 = vadd.f32 %v145, %v189
    %v241 = vadd.f32 %v146, %v191
    %v242 = vadd.f32 %v147, %v232
    %v243 = vadd.f32 %v148, %v234
    %v244 = vmul.f32 %v236, 0.5
    %v245 = vmul.f32 %v237, 0.5
    %v246 = vmul.f32 %v238, 0.5
    %v247 = vmul.f32 %v240, 0.5
    %v248 = vmul.f32 %v241, 0.5
    %v249 = vmul.f32 %v242, 0.5
    %v250 = vtanh.pop %v244
    %v251 = vtanh.pop %v245
    %v252 = vtanh.pop %v246
    %v253 = vtanh.pop %v247
    %v254 = vtanh.pop %v248
    %v255 = vtanh.pop %v249
    %v256 = vmul.f32 %v250, 0.5
    %v257 = vmul.f32 %v251, 0.5
    %v258 = vmul.f32 %v252, 0.5
    %v259 = vmul.f32 %v253, 0.5
    %v260 = vmul.f32 %v254, 0.5
    %v261 = vmul.f32 %v255, 0.5
    %v262 = vadd.f32 %v256, 0.5
    %v263 = vadd.f32 %v257, 0.5
    %v264 = vadd.f32 %v258, 0.5
    %v265 = vadd.f32 %v259, 0.5
    %v266 = vadd.f32 %v260, 0.5
    %v267 = vadd.f32 %v261, 0.5
    %v268 = vtanh.pop %v239
    %v269 = vtanh.pop %v243
    %v270 = vmul.f32 %v263, %v131
    %v271 = vmul.f32 %v266, %v132
    %v272 = vmul.f32 %v262, %v268
    %v273 = vmul.f32 %v265, %v269
    %v274 = vadd.f32 %v270, %v272
    %v275 = vadd.f32 %v271, %v273
    %v276 = vtanh.pop %v274
    %v277 = vtanh.pop %v275
    %v278 = vmul.f32 %v264, %v276
    %v279 = vmul.f32 %v267, %v277
    %v280 = vpack.c.bf16 %v279, %v278
    %v282 = vunpack.c.l.b16 %v280
    %v283 = vunpack.c.h.b16 %v280
    %v284 = vpack.c.b16 %v282, %v282
    %v285 = vpack.c.b16 %v283, %v283
    %s288 = smul.u32 %s133, 2
    %s289 = smul.addr %s288, 4
    %s290 = scalar_lea.vmem [#allocation9], %s289
    %291 = vst [vmem:[%s290] sm:$0xf] %v284
    %292 = vst [vmem:[%s290 + $0x4] sm:$0xf] %v285
    %s293 = scalar_select %p128, 6, 1
    %s294 = smul.u32 %s293, 8
    %s295 = smul.addr %s294, 4
    %s296 = scalar_lea.vmem [#allocation6], %s295
    %v297 = vld [vmem:[%s296] sm:$0xff]
    %v298 = vld [vmem:[%s296 + $0x8] sm:$0xff]
    %v299 = vld [vmem:[%s296 + $0x10] sm:$0xff]
    %v300 = vld [vmem:[%s296 + $0x18] sm:$0xff]
    %v301 = vunpack.c.l.bf16 %v297
    %v302 = vunpack.c.h.bf16 %v297
    %v303 = vunpack.c.l.bf16 %v298
    %v304 = vunpack.c.h.bf16 %v298
    %v305 = vunpack.c.l.bf16 %v299
    %v306 = vunpack.c.h.bf16 %v299
    %v307 = vunpack.c.l.bf16 %v300
    %v308 = vunpack.c.h.bf16 %v300
    %309 = vmatprep.subr.bf16.mxu0 %v97
    %310 = vmatpush1.bf16.msra.mxu0 %v96
    %311 = vmatprep.subr.bf16.mxu0 %v101
    %312 = vmatpush1.bf16.msra.mxu0 %v100
    %313 = vmatprep.subr.bf16.mxu0 %v105
    %314 = vmatpush1.bf16.msra.mxu0 %v104
    %315 = vmatprep.subr.bf16.mxu0 %v109
    %316 = vmatpush1.bf16.msra.mxu0 %v108
    %317 = vmatprep.subr.bf16.mxu0 %v113
    %318 = vmatpush1.bf16.msra.mxu0 %v112
    %319 = vmatprep.subr.bf16.mxu0 %v117
    %320 = vmatpush1.bf16.msra.mxu0 %v116
    %321 = vmatprep.subr.bf16.mxu0 %v121
    %322 = vmatpush1.bf16.msra.mxu0 %v120
    %323 = vmatprep.subr.bf16.mxu0 %v125
    %324 = vmatpush1.bf16.msra.mxu0 %v124
    %325 = vmatprep.subr.bf16.mxu0 0
    %326 = vmatpush1.bf16.msra.mxu0 0
    %327 = vmatprep.subr.bf16.mxu0 0
    %328 = vmatpush1.bf16.msra.mxu0 0
    %329 = vmatprep.subr.bf16.mxu0 0
    %330 = vmatpush1.bf16.msra.mxu0 0
    %331 = vmatprep.subr.bf16.mxu0 0
    %332 = vmatpush1.bf16.msra.mxu0 0
    %333 = vmatprep.subr.bf16.mxu0 0
    %334 = vmatpush1.bf16.msra.mxu0 0
    %335 = vmatprep.subr.bf16.mxu0 0
    %336 = vmatpush1.bf16.msra.mxu0 0
    %337 = vmatprep.subr.bf16.mxu0 0
    %338 = vmatpush1.bf16.msra.mxu0 0
    %339 = vmatprep.subr.bf16.mxu0 0
    %340 = vmatpush1.bf16.msra.mxu0 0
    %341 = vmatprep.mubr.bf16.mxu0 0
    %342 = vmatmul.mubr.bf16.gmra.mrb[0].mxu0 %v280
    %v343 = vpop.f32.mrb[0].mxu0
    %v344 = vadd.f32 0.0, %v343
    %v345 = vpop.f32.mrb[0].mxu0
    %v346 = vadd.f32 0.0, %v345
    %v347 = vpop.f32.mrb[0].mxu0
    %v348 = vadd.f32 0.0, %v347
    %v349 = vpop.f32.mrb[0].mxu0
    %v350 = vadd.f32 0.0, %v349
    %351 = vdwg.mxu0
    %352 = vmatprep.subr.bf16.mxu0 %v99
    %353 = vmatpush1.bf16.msra.mxu0 %v98
    %354 = vmatprep.subr.bf16.mxu0 %v103
    %355 = vmatpush1.bf16.msra.mxu0 %v102
    %356 = vmatprep.subr.bf16.mxu0 %v107
    %357 = vmatpush1.bf16.msra.mxu0 %v106
    %358 = vmatprep.subr.bf16.mxu0 %v111
    %359 = vmatpush1.bf16.msra.mxu0 %v110
    %360 = vmatprep.subr.bf16.mxu0 %v115
    %361 = vmatpush1.bf16.msra.mxu0 %v114
    %362 = vmatprep.subr.bf16.mxu0 %v119
    %363 = vmatpush1.bf16.msra.mxu0 %v118
    %364 = vmatprep.subr.bf16.mxu0 %v123
    %365 = vmatpush1.bf16.msra.mxu0 %v122
    %366 = vmatprep.subr.bf16.mxu0 %v127
    %367 = vmatpush1.bf16.msra.mxu0 %v126
    %368 = vmatprep.subr.bf16.mxu0 0
    %369 = vmatpush1.bf16.msra.mxu0 0
    %370 = vmatprep.subr.bf16.mxu0 0
    %371 = vmatpush1.bf16.msra.mxu0 0
    %372 = vmatprep.subr.bf16.mxu0 0
    %373 = vmatpush1.bf16.msra.mxu0 0
    %374 = vmatprep.subr.bf16.mxu0 0
    %375 = vmatpush1.bf16.msra.mxu0 0
    %376 = vmatprep.subr.bf16.mxu0 0
    %377 = vmatpush1.bf16.msra.mxu0 0
    %378 = vmatprep.subr.bf16.mxu0 0
    %379 = vmatpush1.bf16.msra.mxu0 0
    %380 = vmatprep.subr.bf16.mxu0 0
    %381 = vmatpush1.bf16.msra.mxu0 0
    %382 = vmatprep.subr.bf16.mxu0 0
    %383 = vmatpush1.bf16.msra.mxu0 0
    %384 = vmatprep.mubr.bf16.mxu0 0
    %385 = vmatmul.mubr.bf16.gmra.mrb[0].mxu0 %v280
    %v386 = vpop.f32.mrb[0].mxu0
    %v387 = vadd.f32 0.0, %v386
    %v388 = vpop.f32.mrb[0].mxu0
    %v389 = vadd.f32 0.0, %v388
    %v390 = vpop.f32.mrb[0].mxu0
    %v391 = vadd.f32 0.0, %v390
    %v392 = vpop.f32.mrb[0].mxu0
    %v393 = vadd.f32 0.0, %v392
    %394 = vdwg.mxu0
    %v395 = vadd.f32 %v301, %v344
    %v396 = vadd.f32 %v302, %v346
    %v397 = vadd.f32 %v303, %v387
    %v398 = vadd.f32 %v304, %v389
    %v399 = vadd.f32 %v305, %v348
    %v400 = vadd.f32 %v306, %v350
    %v401 = vadd.f32 %v307, %v391
    %v402 = vadd.f32 %v308, %v393
    %v403 = vmul.f32 %v395, 0.5
    %v404 = vmul.f32 %v396, 0.5
    %v405 = vmul.f32 %v397, 0.5
    %v406 = vmul.f32 %v399, 0.5
    %v407 = vmul.f32 %v400, 0.5
    %v408 = vmul.f32 %v401, 0.5
    %v409 = vtanh.pop %v403
    %v410 = vtanh.pop %v404
    %v411 = vtanh.pop %v405
    %v412 = vtanh.pop %v406
    %v413 = vtanh.pop %v407
    %v414 = vtanh.pop %v408
    %v415 = vmul.f32 %v409, 0.5
    %v416 = vmul.f32 %v410, 0.5
    %v417 = vmul.f32 %v411, 0.5
    %v418 = vmul.f32 %v412, 0.5
    %v419 = vmul.f32 %v413, 0.5
    %v420 = vmul.f32 %v414, 0.5
    %v421 = vadd.f32 %v415, 0.5
    %v422 = vadd.f32 %v416, 0.5
    %v423 = vadd.f32 %v417, 0.5
    %v424 = vadd.f32 %v418, 0.5
    %v425 = vadd.f32 %v419, 0.5
    %v426 = vadd.f32 %v420, 0.5
    %v427 = vtanh.pop %v398
    %v428 = vtanh.pop %v402
    %v429 = vmul.f32 %v422, %v274
    %v430 = vmul.f32 %v425, %v275
    %v431 = vmul.f32 %v421, %v427
    %v432 = vmul.f32 %v424, %v428
    %v433 = vadd.f32 %v429, %v431
    %v434 = vadd.f32 %v430, %v432
    %v435 = vtanh.pop %v433
    %v436 = vtanh.pop %v434
    %v437 = vmul.f32 %v423, %v435
    %v438 = vmul.f32 %v426, %v436
    %v439 = vpack.c.bf16 %v438, %v437
    %v441 = vunpack.c.l.b16 %v439
    %v442 = vunpack.c.h.b16 %v439
    %v443 = vpack.c.b16 %v441, %v441
    %v444 = vpack.c.b16 %v442, %v442
    %s447 = smul.u32 %s293, 2
    %s448 = smul.addr %s447, 4
    %s449 = scalar_lea.vmem [#allocation9], %s448
    %450 = vst [vmem:[%s449] sm:$0xf] %v443
    %451 = vst [vmem:[%s449 + $0x4] sm:$0xf] %v444
    %s452 = scalar_select %p128, 5, 2
    %s453 = smul.u32 %s452, 8
    %s454 = smul.addr %s453, 4
    %s455 = scalar_lea.vmem [#allocation6], %s454
    %v456 = vld [vmem:[%s455] sm:$0xff]
    %v457 = vld [vmem:[%s455 + $0x8] sm:$0xff]
    %v458 = vld [vmem:[%s455 + $0x10] sm:$0xff]
    %v459 = vld [vmem:[%s455 + $0x18] sm:$0xff]
    %v460 = vunpack.c.l.bf16 %v456
    %v461 = vunpack.c.h.bf16 %v456
    %v462 = vunpack.c.l.bf16 %v457
    %v463 = vunpack.c.h.bf16 %v457
    %v464 = vunpack.c.l.bf16 %v458
    %v465 = vunpack.c.h.bf16 %v458
    %v466 = vunpack.c.l.bf16 %v459
    %v467 = vunpack.c.h.bf16 %v459
    %468 = vmatprep.subr.bf16.mxu0 %v97
    %469 = vmatpush1.bf16.msra.mxu0 %v96
    %470 = vmatprep.subr.bf16.mxu0 %v101
    %471 = vmatpush1.bf16.msra.mxu0 %v100
    %472 = vmatprep.subr.bf16.mxu0 %v105
    %473 = vmatpush1.bf16.msra.mxu0 %v104
    %474 = vmatprep.subr.bf16.mxu0 %v109
    %475 = vmatpush1.bf16.msra.mxu0 %v108
    %476 = vmatprep.subr.bf16.mxu0 %v113
    %477 = vmatpush1.bf16.msra.mxu0 %v112
    %478 = vmatprep.subr.bf16.mxu0 %v117
    %479 = vmatpush1.bf16.msra.mxu0 %v116
    %480 = vmatprep.subr.bf16.mxu0 %v121
    %481 = vmatpush1.bf16.msra.mxu0 %v120
    %482 = vmatprep.subr.bf16.mxu0 %v125
    %483 = vmatpush1.bf16.msra.mxu0 %v124
    %484 = vmatprep.subr.bf16.mxu0 0
    %485 = vmatpush1.bf16.msra.mxu0 0
    %486 = vmatprep.subr.bf16.mxu0 0
    %487 = vmatpush1.bf16.msra.mxu0 0
    %488 = vmatprep.subr.bf16.mxu0 0
    %489 = vmatpush1.bf16.msra.mxu0 0
    %490 = vmatprep.subr.bf16.mxu0 0
    %491 = vmatpush1.bf16.msra.mxu0 0
    %492 = vmatprep.subr.bf16.mxu0 0
    %493 = vmatpush1.bf16.msra.mxu0 0
    %494 = vmatprep.subr.bf16.mxu0 0
    %495 = vmatpush1.bf16.msra.mxu0 0
    %496 = vmatprep.subr.bf16.mxu0 0
    %497 = vmatpush1.bf16.msra.mxu0 0
    %498 = vmatprep.subr.bf16.mxu0 0
    %499 = vmatpush1.bf16.msra.mxu0 0
    %500 = vmatprep.mubr.bf16.mxu0 0
    %501 = vmatmul.mubr.bf16.gmra.mrb[0].mxu0 %v439
    %v502 = vpop.f32.mrb[0].mxu0
    %v503 = vadd.f32 0.0, %v502
    %v504 = vpop.f32.mrb[0].mxu0
    %v505 = vadd.f32 0.0, %v504
    %v506 = vpop.f32.mrb[0].mxu0
    %v507 = vadd.f32 0.0, %v506
    %v508 = vpop.f32.mrb[0].mxu0
    %v509 = vadd.f32 0.0, %v508
    %510 = vdwg.mxu0
    %511 = vmatprep.subr.bf16.mxu0 %v99
    %512 = vmatpush1.bf16.msra.mxu0 %v98
    %513 = vmatprep.subr.bf16.mxu0 %v103
    %514 = vmatpush1.bf16.msra.mxu0 %v102
    %515 = vmatprep.subr.bf16.mxu0 %v107
    %516 = vmatpush1.bf16.msra.mxu0 %v106
    %517 = vmatprep.subr.bf16.mxu0 %v111
    %518 = vmatpush1.bf16.msra.mxu0 %v110
    %519 = vmatprep.subr.bf16.mxu0 %v115
    %520 = vmatpush1.bf16.msra.mxu0 %v114
    %521 = vmatprep.subr.bf16.mxu0 %v119
    %522 = vmatpush1.bf16.msra.mxu0 %v118
    %523 = vmatprep.subr.bf16.mxu0 %v123
    %524 = vmatpush1.bf16.msra.mxu0 %v122
    %525 = vmatprep.subr.bf16.mxu0 %v127
    %526 = vmatpush1.bf16.msra.mxu0 %v126
    %527 = vmatprep.subr.bf16.mxu0 0
    %528 = vmatpush1.bf16.msra.mxu0 0
    %529 = vmatprep.subr.bf16.mxu0 0
    %530 = vmatpush1.bf16.msra.mxu0 0
    %531 = vmatprep.subr.bf16.mxu0 0
    %532 = vmatpush1.bf16.msra.mxu0 0
    %533 = vmatprep.subr.bf16.mxu0 0
    %534 = vmatpush1.bf16.msra.mxu0 0
    %535 = vmatprep.subr.bf16.mxu0 0
    %536 = vmatpush1.bf16.msra.mxu0 0
    %537 = vmatprep.subr.bf16.mxu0 0
    %538 = vmatpush1.bf16.msra.mxu0 0
    %539 = vmatprep.subr.bf16.mxu0 0
    %540 = vmatpush1.bf16.msra.mxu0 0
    %541 = vmatprep.subr.bf16.mxu0 0
    %542 = vmatpush1.bf16.msra.mxu0 0
    %543 = vmatprep.mubr.bf16.mxu0 0
    %544 = vmatmul.mubr.bf16.gmra.mrb[0].mxu0 %v439
    %v545 = vpop.f32.mrb[0].mxu0
    %v546 = vadd.f32 0.0, %v545
    %v547 = vpop.f32.mrb[0].mxu0
    %v548 = vadd.f32 0.0, %v547
    %v549 = vpop.f32.mrb[0].mxu0
    %v550 = vadd.f32 0.0, %v549
    %v551 = vpop.f32.mrb[0].mxu0
    %v552 = vadd.f32 0.0, %v551
    %553 = vdwg.mxu0
    %v554 = vadd.f32 %v460, %v503
    %v555 = vadd.f32 %v461, %v505
    %v556 = vadd.f32 %v462, %v546
    %v557 = vadd.f32 %v463, %v548
    %v558 = vadd.f32 %v464, %v507
    %v559 = vadd.f32 %v465, %v509
    %v560 = vadd.f32 %v466, %v550
    %v561 = vadd.f32 %v467, %v552
    %v562 = vmul.f32 %v554, 0.5
    %v563 = vmul.f32 %v555, 0.5
    %v564 = vmul.f32 %v556, 0.5
    %v565 = vmul.f32 %v558, 0.5
    %v566 = vmul.f32 %v559, 0.5
    %v567 = vmul.f32 %v560, 0.5
    %v568 = vtanh.pop %v562
    %v569 = vtanh.pop %v563
    %v570 = vtanh.pop %v564
    %v571 = vtanh.pop %v565
    %v572 = vtanh.pop %v566
    %v573 = vtanh.pop %v567
    %v574 = vmul.f32 %v568, 0.5
    %v575 = vmul.f32 %v569, 0.5
    %v576 = vmul.f32 %v570, 0.5
    %v577 = vmul.f32 %v571, 0.5
    %v578 = vmul.f32 %v572, 0.5
    %v579 = vmul.f32 %v573, 0.5
    %v580 = vadd.f32 %v574, 0.5
    %v581 = vadd.f32 %v575, 0.5
    %v582 = vadd.f32 %v576, 0.5
    %v583 = vadd.f32 %v577, 0.5
    %v584 = vadd.f32 %v578, 0.5
    %v585 = vadd.f32 %v579, 0.5
    %v586 = vtanh.pop %v557
    %v587 = vtanh.pop %v561
    %v588 = vmul.f32 %v581, %v433
    %v589 = vmul.f32 %v584, %v434
    %v590 = vmul.f32 %v580, %v586
    %v591 = vmul.f32 %v583, %v587
    %v592 = vadd.f32 %v588, %v590
    %v593 = vadd.f32 %v589, %v591
    %v594 = vtanh.pop %v592
    %v595 = vtanh.pop %v593
    %v596 = vmul.f32 %v582, %v594
    %v597 = vmul.f32 %v585, %v595
    %v598 = vpack.c.bf16 %v597, %v596
    %v600 = vunpack.c.l.b16 %v598
    %v601 = vunpack.c.h.b16 %v598
    %v602 = vpack.c.b16 %v600, %v600
    %v603 = vpack.c.b16 %v601, %v601
    %s606 = smul.u32 %s452, 2
    %s607 = smul.addr %s606, 4
    %s608 = scalar_lea.vmem [#allocation9], %s607
    %609 = vst [vmem:[%s608] sm:$0xf] %v602
    %610 = vst [vmem:[%s608 + $0x4] sm:$0xf] %v603
    %s611 = scalar_select %p128, 4, 3
    %s612 = smul.u32 %s611, 8
    %s613 = smul.addr %s612, 4
    %s614 = scalar_lea.vmem [#allocation6], %s613
    %v615 = vld [vmem:[%s614] sm:$0xff]
    %v616 = vld [vmem:[%s614 + $0x8] sm:$0xff]
    %v617 = vld [vmem:[%s614 + $0x10] sm:$0xff]
    %v618 = vld [vmem:[%s614 + $0x18] sm:$0xff]
    %v619 = vunpack.c.l.bf16 %v615
    %v620 = vunpack.c.h.bf16 %v615
    %v621 = vunpack.c.l.bf16 %v616
    %v622 = vunpack.c.h.bf16 %v616
    %v623 = vunpack.c.l.bf16 %v617
    %v624 = vunpack.c.h.bf16 %v617
    %v625 = vunpack.c.l.bf16 %v618
    %v626 = vunpack.c.h.bf16 %v618
    %627 = vmatprep.subr.bf16.mxu0 %v97
    %628 = vmatpush1.bf16.msra.mxu0 %v96
    %629 = vmatprep.subr.bf16.mxu0 %v101
    %630 = vmatpush1.bf16.msra.mxu0 %v100
    %631 = vmatprep.subr.bf16.mxu0 %v105
    %632 = vmatpush1.bf16.msra.mxu0 %v104
    %633 = vmatprep.subr.bf16.mxu0 %v109
    %634 = vmatpush1.bf16.msra.mxu0 %v108
    %635 = vmatprep.subr.bf16.mxu0 %v113
    %636 = vmatpush1.bf16.msra.mxu0 %v112
    %637 = vmatprep.subr.bf16.mxu0 %v117
    %638 = vmatpush1.bf16.msra.mxu0 %v116
    %639 = vmatprep.subr.bf16.mxu0 %v121
    %640 = vmatpush1.bf16.msra.mxu0 %v120
    %641 = vmatprep.subr.bf16.mxu0 %v125
    %642 = vmatpush1.bf16.msra.mxu0 %v124
    %643 = vmatprep.subr.bf16.mxu0 0
    %644 = vmatpush1.bf16.msra.mxu0 0
    %645 = vmatprep.subr.bf16.mxu0 0
    %646 = vmatpush1.bf16.msra.mxu0 0
    %647 = vmatprep.subr.bf16.mxu0 0
    %648 = vmatpush1.bf16.msra.mxu0 0
    %649 = vmatprep.subr.bf16.mxu0 0
    %650 = vmatpush1.bf16.msra.mxu0 0
    %651 = vmatprep.subr.bf16.mxu0 0
    %652 = vmatpush1.bf16.msra.mxu0 0
    %653 = vmatprep.subr.bf16.mxu0 0
    %654 = vmatpush1.bf16.msra.mxu0 0
    %655 = vmatprep.subr.bf16.mxu0 0
    %656 = vmatpush1.bf16.msra.mxu0 0
    %657 = vmatprep.subr.bf16.mxu0 0
    %658 = vmatpush1.bf16.msra.mxu0 0
    %659 = vmatprep.mubr.bf16.mxu0 0
    %660 = vmatmul.mubr.bf16.gmra.mrb[0].mxu0 %v598
    %v661 = vpop.f32.mrb[0].mxu0
    %v662 = vadd.f32 0.0, %v661
    %v663 = vpop.f32.mrb[0].mxu0
    %v664 = vadd.f32 0.0, %v663
    %v665 = vpop.f32.mrb[0].mxu0
    %v666 = vadd.f32 0.0, %v665
    %v667 = vpop.f32.mrb[0].mxu0
    %v668 = vadd.f32 0.0, %v667
    %669 = vdwg.mxu0
    %670 = vmatprep.subr.bf16.mxu0 %v99
    %671 = vmatpush1.bf16.msra.mxu0 %v98
    %672 = vmatprep.subr.bf16.mxu0 %v103
    %673 = vmatpush1.bf16.msra.mxu0 %v102
    %674 = vmatprep.subr.bf16.mxu0 %v107
    %675 = vmatpush1.bf16.msra.mxu0 %v106
    %676 = vmatprep.subr.bf16.mxu0 %v111
    %677 = vmatpush1.bf16.msra.mxu0 %v110
    %678 = vmatprep.subr.bf16.mxu0 %v115
    %679 = vmatpush1.bf16.msra.mxu0 %v114
    %680 = vmatprep.subr.bf16.mxu0 %v119
    %681 = vmatpush1.bf16.msra.mxu0 %v118
    %682 = vmatprep.subr.bf16.mxu0 %v123
    %683 = vmatpush1.bf16.msra.mxu0 %v122
    %684 = vmatprep.subr.bf16.mxu0 %v127
    %685 = vmatpush1.bf16.msra.mxu0 %v126
    %686 = vmatprep.subr.bf16.mxu0 0
    %687 = vmatpush1.bf16.msra.mxu0 0
    %688 = vmatprep.subr.bf16.mxu0 0
    %689 = vmatpush1.bf16.msra.mxu0 0
    %690 = vmatprep.subr.bf16.mxu0 0
    %691 = vmatpush1.bf16.msra.mxu0 0
    %692 = vmatprep.subr.bf16.mxu0 0
    %693 = vmatpush1.bf16.msra.mxu0 0
    %694 = vmatprep.subr.bf16.mxu0 0
    %695 = vmatpush1.bf16.msra.mxu0 0
    %696 = vmatprep.subr.bf16.mxu0 0
    %697 = vmatpush1.bf16.msra.mxu0 0
    %698 = vmatprep.subr.bf16.mxu0 0
    %699 = vmatpush1.bf16.msra.mxu0 0
    %700 = vmatprep.subr.bf16.mxu0 0
    %701 = vmatpush1.bf16.msra.mxu0 0
    %702 = vmatprep.mubr.bf16.mxu0 0
    %703 = vmatmul.mubr.bf16.gmra.mrb[0].mxu0 %v598
    %v704 = vpop.f32.mrb[0].mxu0
    %v705 = vadd.f32 0.0, %v704
    %v706 = vpop.f32.mrb[0].mxu0
    %v707 = vadd.f32 0.0, %v706
    %v708 = vpop.f32.mrb[0].mxu0
    %v709 = vadd.f32 0.0, %v708
    %v710 = vpop.f32.mrb[0].mxu0
    %v711 = vadd.f32 0.0, %v710
    %712 = vdwg.mxu0
    %v713 = vadd.f32 %v619, %v662
    %v714 = vadd.f32 %v620, %v664
    %v715 = vadd.f32 %v621, %v705
    %v716 = vadd.f32 %v622, %v707
    %v717 = vadd.f32 %v623, %v666
    %v718 = vadd.f32 %v624, %v668
    %v719 = vadd.f32 %v625, %v709
    %v720 = vadd.f32 %v626, %v711
    %v721 = vmul.f32 %v713, 0.5
    %v722 = vmul.f32 %v714, 0.5
    %v723 = vmul.f32 %v715, 0.5
    %v724 = vmul.f32 %v717, 0.5
    %v725 = vmul.f32 %v718, 0.5
    %v726 = vmul.f32 %v719, 0.5
    %v727 = vtanh.pop %v721
    %v728 = vtanh.pop %v722
    %v729 = vtanh.pop %v723
    %v730 = vtanh.pop %v724
    %v731 = vtanh.pop %v725
    %v732 = vtanh.pop %v726
    %v733 = vmul.f32 %v727, 0.5
    %v734 = vmul.f32 %v728, 0.5
    %v735 = vmul.f32 %v729, 0.5
    %v736 = vmul.f32 %v730, 0.5
    %v737 = vmul.f32 %v731, 0.5
    %v738 = vmul.f32 %v732, 0.5
    %v739 = vadd.f32 %v733, 0.5
    %v740 = vadd.f32 %v734, 0.5
    %v741 = vadd.f32 %v735, 0.5
    %v742 = vadd.f32 %v736, 0.5
    %v743 = vadd.f32 %v737, 0.5
    %v744 = vadd.f32 %v738, 0.5
    %v745 = vtanh.pop %v716
    %v746 = vtanh.pop %v720
    %v747 = vmul.f32 %v740, %v592
    %v748 = vmul.f32 %v743, %v593
    %v749 = vmul.f32 %v739, %v745
    %v750 = vmul.f32 %v742, %v746
    %v751 = vadd.f32 %v747, %v749
    %v752 = vadd.f32 %v748, %v750
    %v753 = vtanh.pop %v751
    %v754 = vtanh.pop %v752
    %v755 = vmul.f32 %v741, %v753
    %v756 = vmul.f32 %v744, %v754
    %v757 = vpack.c.bf16 %v756, %v755
    %v759 = vunpack.c.l.b16 %v757
    %v760 = vunpack.c.h.b16 %v757
    %v761 = vpack.c.b16 %v759, %v759
    %v762 = vpack.c.b16 %v760, %v760
    %s765 = smul.u32 %s611, 2
    %s766 = smul.addr %s765, 4
    %s767 = scalar_lea.vmem [#allocation9], %s766
    %768 = vst [vmem:[%s767] sm:$0xf] %v761
    %769 = vst [vmem:[%s767 + $0x4] sm:$0xf] %v762
    %s770 = scalar_select %p128, 3, 4
    %s771 = smul.u32 %s770, 8
    %s772 = smul.addr %s771, 4
    %s773 = scalar_lea.vmem [#allocation6], %s772
    %v774 = vld [vmem:[%s773] sm:$0xff]
    %v775 = vld [vmem:[%s773 + $0x8] sm:$0xff]
    %v776 = vld [vmem:[%s773 + $0x10] sm:$0xff]
    %v777 = vld [vmem:[%s773 + $0x18] sm:$0xff]
    %v778 = vunpack.c.l.bf16 %v774
    %v779 = vunpack.c.h.bf16 %v774
    %v780 = vunpack.c.l.bf16 %v775
    %v781 = vunpack.c.h.bf16 %v775
    %v782 = vunpack.c.l.bf16 %v776
    %v783 = vunpack.c.h.bf16 %v776
    %v784 = vunpack.c.l.bf16 %v777
    %v785 = vunpack.c.h.bf16 %v777
    %786 = vmatprep.subr.bf16.mxu0 %v97
    %787 = vmatpush1.bf16.msra.mxu0 %v96
    %788 = vmatprep.subr.bf16.mxu0 %v101
    %789 = vmatpush1.bf16.msra.mxu0 %v100
    %790 = vmatprep.subr.bf16.mxu0 %v105
    %791 = vmatpush1.bf16.msra.mxu0 %v104
    %792 = vmatprep.subr.bf16.mxu0 %v109
    %793 = vmatpush1.bf16.msra.mxu0 %v108
    %794 = vmatprep.subr.bf16.mxu0 %v113
    %795 = vmatpush1.bf16.msra.mxu0 %v112
    %796 = vmatprep.subr.bf16.mxu0 %v117
    %797 = vmatpush1.bf16.msra.mxu0 %v116
    %798 = vmatprep.subr.bf16.mxu0 %v121
    %799 = vmatpush1.bf16.msra.mxu0 %v120
    %800 = vmatprep.subr.bf16.mxu0 %v125
    %801 = vmatpush1.bf16.msra.mxu0 %v124
    %802 = vmatprep.subr.bf16.mxu0 0
    %803 = vmatpush1.bf16.msra.mxu0 0
    %804 = vmatprep.subr.bf16.mxu0 0
    %805 = vmatpush1.bf16.msra.mxu0 0
    %806 = vmatprep.subr.bf16.mxu0 0
    %807 = vmatpush1.bf16.msra.mxu0 0
    %808 = vmatprep.subr.bf16.mxu0 0
    %809 = vmatpush1.bf16.msra.mxu0 0
    %810 = vmatprep.subr.bf16.mxu0 0
    %811 = vmatpush1.bf16.msra.mxu0 0
    %812 = vmatprep.subr.bf16.mxu0 0
    %813 = vmatpush1.bf16.msra.mxu0 0
    %814 = vmatprep.subr.bf16.mxu0 0
    %815 = vmatpush1.bf16.msra.mxu0 0
    %816 = vmatprep.subr.bf16.mxu0 0
    %817 = vmatpush1.bf16.msra.mxu0 0
    %818 = vmatprep.mubr.bf16.mxu0 0
    %819 = vmatmul.mubr.bf16.gmra.mrb[0].mxu0 %v757
    %v820 = vpop.f32.mrb[0].mxu0
    %v821 = vadd.f32 0.0, %v820
    %v822 = vpop.f32.mrb[0].mxu0
    %v823 = vadd.f32 0.0, %v822
    %v824 = vpop.f32.mrb[0].mxu0
    %v825 = vadd.f32 0.0, %v824
    %v826 = vpop.f32.mrb[0].mxu0
    %v827 = vadd.f32 0.0, %v826
    %828 = vdwg.mxu0
    %829 = vmatprep.subr.bf16.mxu0 %v99
    %830 = vmatpush1.bf16.msra.mxu0 %v98
    %831 = vmatprep.subr.bf16.mxu0 %v103
    %832 = vmatpush1.bf16.msra.mxu0 %v102
    %833 = vmatprep.subr.bf16.mxu0 %v107
    %834 = vmatpush1.bf16.msra.mxu0 %v106
    %835 = vmatprep.subr.bf16.mxu0 %v111
    %836 = vmatpush1.bf16.msra.mxu0 %v110
    %837 = vmatprep.subr.bf16.mxu0 %v115
    %838 = vmatpush1.bf16.msra.mxu0 %v114
    %839 = vmatprep.subr.bf16.mxu0 %v119
    %840 = vmatpush1.bf16.msra.mxu0 %v118
    %841 = vmatprep.subr.bf16.mxu0 %v123
    %842 = vmatpush1.bf16.msra.mxu0 %v122
    %843 = vmatprep.subr.bf16.mxu0 %v127
    %844 = vmatpush1.bf16.msra.mxu0 %v126
    %845 = vmatprep.subr.bf16.mxu0 0
    %846 = vmatpush1.bf16.msra.mxu0 0
    %847 = vmatprep.subr.bf16.mxu0 0
    %848 = vmatpush1.bf16.msra.mxu0 0
    %849 = vmatprep.subr.bf16.mxu0 0
    %850 = vmatpush1.bf16.msra.mxu0 0
    %851 = vmatprep.subr.bf16.mxu0 0
    %852 = vmatpush1.bf16.msra.mxu0 0
    %853 = vmatprep.subr.bf16.mxu0 0
    %854 = vmatpush1.bf16.msra.mxu0 0
    %855 = vmatprep.subr.bf16.mxu0 0
    %856 = vmatpush1.bf16.msra.mxu0 0
    %857 = vmatprep.subr.bf16.mxu0 0
    %858 = vmatpush1.bf16.msra.mxu0 0
    %859 = vmatprep.subr.bf16.mxu0 0
    %860 = vmatpush1.bf16.msra.mxu0 0
    %861 = vmatprep.mubr.bf16.mxu0 0
    %862 = vmatmul.mubr.bf16.gmra.mrb[0].mxu0 %v757
    %v863 = vpop.f32.mrb[0].mxu0
    %v864 = vadd.f32 0.0, %v863
    %v865 = vpop.f32.mrb[0].mxu0
    %v866 = vadd.f32 0.0, %v865
    %v867 = vpop.f32.mrb[0].mxu0
    %v868 = vadd.f32 0.0, %v867
    %v869 = vpop.f32.mrb[0].mxu0
    %v870 = vadd.f32 0.0, %v869
    %871 = vdwg.mxu0
    %v872 = vadd.f32 %v778, %v821
    %v873 = vadd.f32 %v779, %v823
    %v874 = vadd.f32 %v780, %v864
    %v875 = vadd.f32 %v781, %v866
    %v876 = vadd.f32 %v782, %v825
    %v877 = vadd.f32 %v783, %v827
    %v878 = vadd.f32 %v784, %v868
    %v879 = vadd.f32 %v785, %v870
    %v880 = vmul.f32 %v872, 0.5
    %v881 = vmul.f32 %v873, 0.5
    %v882 = vmul.f32 %v874, 0.5
    %v883 = vmul.f32 %v876, 0.5
    %v884 = vmul.f32 %v877, 0.5
    %v885 = vmul.f32 %v878, 0.5
    %v886 = vtanh.pop %v880
    %v887 = vtanh.pop %v881
    %v888 = vtanh.pop %v882
    %v889 = vtanh.pop %v883
    %v890 = vtanh.pop %v884
    %v891 = vtanh.pop %v885
    %v892 = vmul.f32 %v886, 0.5
    %v893 = vmul.f32 %v887, 0.5
    %v894 = vmul.f32 %v888, 0.5
    %v895 = vmul.f32 %v889, 0.5
    %v896 = vmul.f32 %v890, 0.5
    %v897 = vmul.f32 %v891, 0.5
    %v898 = vadd.f32 %v892, 0.5
    %v899 = vadd.f32 %v893, 0.5
    %v900 = vadd.f32 %v894, 0.5
    %v901 = vadd.f32 %v895, 0.5
    %v902 = vadd.f32 %v896, 0.5
    %v903 = vadd.f32 %v897, 0.5
    %v904 = vtanh.pop %v875
    %v905 = vtanh.pop %v879
    %v906 = vmul.f32 %v899, %v751
    %v907 = vmul.f32 %v902, %v752
    %v908 = vmul.f32 %v898, %v904
    %v909 = vmul.f32 %v901, %v905
    %v910 = vadd.f32 %v906, %v908
    %v911 = vadd.f32 %v907, %v909
    %v912 = vtanh.pop %v910
    %v913 = vtanh.pop %v911
    %v914 = vmul.f32 %v900, %v912
    %v915 = vmul.f32 %v903, %v913
    %v916 = vpack.c.bf16 %v915, %v914
    %v918 = vunpack.c.l.b16 %v916
    %v919 = vunpack.c.h.b16 %v916
    %v920 = vpack.c.b16 %v918, %v918
    %v921 = vpack.c.b16 %v919, %v919
    %s924 = smul.u32 %s770, 2
    %s925 = smul.addr %s924, 4
    %s926 = scalar_lea.vmem [#allocation9], %s925
    %927 = vst [vmem:[%s926] sm:$0xf] %v920
    %928 = vst [vmem:[%s926 + $0x4] sm:$0xf] %v921
    %s929 = scalar_select %p128, 2, 5
    %s930 = smul.u32 %s929, 8
    %s931 = smul.addr %s930, 4
    %s932 = scalar_lea.vmem [#allocation6], %s931
    %v933 = vld [vmem:[%s932] sm:$0xff]
    %v934 = vld [vmem:[%s932 + $0x8] sm:$0xff]
    %v935 = vld [vmem:[%s932 + $0x10] sm:$0xff]
    %v936 = vld [vmem:[%s932 + $0x18] sm:$0xff]
    %v937 = vunpack.c.l.bf16 %v933
    %v938 = vunpack.c.h.bf16 %v933
    %v939 = vunpack.c.l.bf16 %v934
    %v940 = vunpack.c.h.bf16 %v934
    %v941 = vunpack.c.l.bf16 %v935
    %v942 = vunpack.c.h.bf16 %v935
    %v943 = vunpack.c.l.bf16 %v936
    %v944 = vunpack.c.h.bf16 %v936
    %945 = vmatprep.subr.bf16.mxu0 %v97
    %946 = vmatpush1.bf16.msra.mxu0 %v96
    %947 = vmatprep.subr.bf16.mxu0 %v101
    %948 = vmatpush1.bf16.msra.mxu0 %v100
    %949 = vmatprep.subr.bf16.mxu0 %v105
    %950 = vmatpush1.bf16.msra.mxu0 %v104
    %951 = vmatprep.subr.bf16.mxu0 %v109
    %952 = vmatpush1.bf16.msra.mxu0 %v108
    %953 = vmatprep.subr.bf16.mxu0 %v113
    %954 = vmatpush1.bf16.msra.mxu0 %v112
    %955 = vmatprep.subr.bf16.mxu0 %v117
    %956 = vmatpush1.bf16.msra.mxu0 %v116
    %957 = vmatprep.subr.bf16.mxu0 %v121
    %958 = vmatpush1.bf16.msra.mxu0 %v120
    %959 = vmatprep.subr.bf16.mxu0 %v125
    %960 = vmatpush1.bf16.msra.mxu0 %v124
    %961 = vmatprep.subr.bf16.mxu0 0
    %962 = vmatpush1.bf16.msra.mxu0 0
    %963 = vmatprep.subr.bf16.mxu0 0
    %964 = vmatpush1.bf16.msra.mxu0 0
    %965 = vmatprep.subr.bf16.mxu0 0
    %966 = vmatpush1.bf16.msra.mxu0 0
    %967 = vmatprep.subr.bf16.mxu0 0
    %968 = vmatpush1.bf16.msra.mxu0 0
    %969 = vmatprep.subr.bf16.mxu0 0
    %970 = vmatpush1.bf16.msra.mxu0 0
    %971 = vmatprep.subr.bf16.mxu0 0
    %972 = vmatpush1.bf16.msra.mxu0 0
    %973 = vmatprep.subr.bf16.mxu0 0
    %974 = vmatpush1.bf16.msra.mxu0 0
    %975 = vmatprep.subr.bf16.mxu0 0
    %976 = vmatpush1.bf16.msra.mxu0 0
    %977 = vmatprep.mubr.bf16.mxu0 0
    %978 = vmatmul.mubr.bf16.gmra.mrb[0].mxu0 %v916
    %v979 = vpop.f32.mrb[0].mxu0
    %v980 = vadd.f32 0.0, %v979
    %v981 = vpop.f32.mrb[0].mxu0
    %v982 = vadd.f32 0.0, %v981
    %v983 = vpop.f32.mrb[0].mxu0
    %v984 = vadd.f32 0.0, %v983
    %v985 = vpop.f32.mrb[0].mxu0
    %v986 = vadd.f32 0.0, %v985
    %987 = vdwg.mxu0
    %988 = vmatprep.subr.bf16.mxu0 %v99
    %989 = vmatpush1.bf16.msra.mxu0 %v98
    %990 = vmatprep.subr.bf16.mxu0 %v103
    %991 = vmatpush1.bf16.msra.mxu0 %v102
    %992 = vmatprep.subr.bf16.mxu0 %v107
    %993 = vmatpush1.bf16.msra.mxu0 %v106
    %994 = vmatprep.subr.bf16.mxu0 %v111
    %995 = vmatpush1.bf16.msra.mxu0 %v110
    %996 = vmatprep.subr.bf16.mxu0 %v115
    %997 = vmatpush1.bf16.msra.mxu0 %v114
    %998 = vmatprep.subr.bf16.mxu0 %v119
    %999 = vmatpush1.bf16.msra.mxu0 %v118
    %1000 = vmatprep.subr.bf16.mxu0 %v123
    %1001 = vmatpush1.bf16.msra.mxu0 %v122
    %1002 = vmatprep.subr.bf16.mxu0 %v127
    %1003 = vmatpush1.bf16.msra.mxu0 %v126
    %1004 = vmatprep.subr.bf16.mxu0 0
    %1005 = vmatpush1.bf16.msra.mxu0 0
    %1006 = vmatprep.subr.bf16.mxu0 0
    %1007 = vmatpush1.bf16.msra.mxu0 0
    %1008 = vmatprep.subr.bf16.mxu0 0
    %1009 = vmatpush1.bf16.msra.mxu0 0
    %1010 = vmatprep.subr.bf16.mxu0 0
    %1011 = vmatpush1.bf16.msra.mxu0 0
    %1012 = vmatprep.subr.bf16.mxu0 0
    %1013 = vmatpush1.bf16.msra.mxu0 0
    %1014 = vmatprep.subr.bf16.mxu0 0
    %1015 = vmatpush1.bf16.msra.mxu0 0
    %1016 = vmatprep.subr.bf16.mxu0 0
    %1017 = vmatpush1.bf16.msra.mxu0 0
    %1018 = vmatprep.subr.bf16.mxu0 0
    %1019 = vmatpush1.bf16.msra.mxu0 0
    %1020 = vmatprep.mubr.bf16.mxu0 0
    %1021 = vmatmul.mubr.bf16.gmra.mrb[0].mxu0 %v916
    %v1022 = vpop.f32.mrb[0].mxu0
    %v1023 = vadd.f32 0.0, %v1022
    %v1024 = vpop.f32.mrb[0].mxu0
    %v1025 = vadd.f32 0.0, %v1024
    %v1026 = vpop.f32.mrb[0].mxu0
    %v1027 = vadd.f32 0.0, %v1026
    %v1028 = vpop.f32.mrb[0].mxu0
    %v1029 = vadd.f32 0.0, %v1028
    %1030 = vdwg.mxu0
    %v1031 = vadd.f32 %v937, %v980
    %v1032 = vadd.f32 %v938, %v982
    %v1033 = vadd.f32 %v939, %v1023
    %v1034 = vadd.f32 %v940, %v1025
    %v1035 = vadd.f32 %v941, %v984
    %v1036 = vadd.f32 %v942, %v986
    %v1037 = vadd.f32 %v943, %v1027
    %v1038 = vadd.f32 %v944, %v1029
    %v1039 = vmul.f32 %v1031, 0.5
    %v1040 = vmul.f32 %v1032, 0.5
    %v1041 = vmul.f32 %v1033, 0.5
    %v1042 = vmul.f32 %v1035, 0.5
    %v1043 = vmul.f32 %v1036, 0.5
    %v1044 = vmul.f32 %v1037, 0.5
    %v1045 = vtanh.pop %v1039
    %v1046 = vtanh.pop %v1040
    %v1047 = vtanh.pop %v1041
    %v1048 = vtanh.pop %v1042
    %v1049 = vtanh.pop %v1043
    %v1050 = vtanh.pop %v1044
    %v1051 = vmul.f32 %v1045, 0.5
    %v1052 = vmul.f32 %v1046, 0.5
    %v1053 = vmul.f32 %v1047, 0.5
    %v1054 = vmul.f32 %v1048, 0.5
    %v1055 = vmul.f32 %v1049, 0.5
    %v1056 = vmul.f32 %v1050, 0.5
    %v1057 = vadd.f32 %v1051, 0.5
    %v1058 = vadd.f32 %v1052, 0.5
    %v1059 = vadd.f32 %v1053, 0.5
    %v1060 = vadd.f32 %v1054, 0.5
    %v1061 = vadd.f32 %v1055, 0.5
    %v1062 = vadd.f32 %v1056, 0.5
    %v1063 = vtanh.pop %v1034
    %v1064 = vtanh.pop %v1038
    %v1065 = vmul.f32 %v1058, %v910
    %v1066 = vmul.f32 %v1061, %v911
    %v1067 = vmul.f32 %v1057, %v1063
    %v1068 = vmul.f32 %v1060, %v1064
    %v1069 = vadd.f32 %v1065, %v1067
    %v1070 = vadd.f32 %v1066, %v1068
    %v1071 = vtanh.pop %v1069
    %v1072 = vtanh.pop %v1070
    %v1073 = vmul.f32 %v1059, %v1071
    %v1074 = vmul.f32 %v1062, %v1072
    %v1075 = vpack.c.bf16 %v1074, %v1073
    %v1077 = vunpack.c.l.b16 %v1075
    %v1078 = vunpack.c.h.b16 %v1075
    %v1079 = vpack.c.b16 %v1077, %v1077
    %v1080 = vpack.c.b16 %v1078, %v1078
    %s1083 = smul.u32 %s929, 2
    %s1084 = smul.addr %s1083, 4
    %s1085 = scalar_lea.vmem [#allocation9], %s1084
    %1086 = vst [vmem:[%s1085] sm:$0xf] %v1079
    %1087 = vst [vmem:[%s1085 + $0x4] sm:$0xf] %v1080
    %s1088 = scalar_select %p128, 1, 6
    %s1089 = smul.u32 %s1088, 8
    %s1090 = smul.addr %s1089, 4
    %s1091 = scalar_lea.vmem [#allocation6], %s1090
    %v1092 = vld [vmem:[%s1091] sm:$0xff]
    %v1093 = vld [vmem:[%s1091 + $0x8] sm:$0xff]
    %v1094 = vld [vmem:[%s1091 + $0x10] sm:$0xff]
    %v1095 = vld [vmem:[%s1091 + $0x18] sm:$0xff]
    %v1096 = vunpack.c.l.bf16 %v1092
    %v1097 = vunpack.c.h.bf16 %v1092
    %v1098 = vunpack.c.l.bf16 %v1093
    %v1099 = vunpack.c.h.bf16 %v1093
    %v1100 = vunpack.c.l.bf16 %v1094
    %v1101 = vunpack.c.h.bf16 %v1094
    %v1102 = vunpack.c.l.bf16 %v1095
    %v1103 = vunpack.c.h.bf16 %v1095
    %1104 = vmatprep.subr.bf16.mxu0 %v97
    %1105 = vmatpush1.bf16.msra.mxu0 %v96
    %1106 = vmatprep.subr.bf16.mxu0 %v101
    %1107 = vmatpush1.bf16.msra.mxu0 %v100
    %1108 = vmatprep.subr.bf16.mxu0 %v105
    %1109 = vmatpush1.bf16.msra.mxu0 %v104
    %1110 = vmatprep.subr.bf16.mxu0 %v109
    %1111 = vmatpush1.bf16.msra.mxu0 %v108
    %1112 = vmatprep.subr.bf16.mxu0 %v113
    %1113 = vmatpush1.bf16.msra.mxu0 %v112
    %1114 = vmatprep.subr.bf16.mxu0 %v117
    %1115 = vmatpush1.bf16.msra.mxu0 %v116
    %1116 = vmatprep.subr.bf16.mxu0 %v121
    %1117 = vmatpush1.bf16.msra.mxu0 %v120
    %1118 = vmatprep.subr.bf16.mxu0 %v125
    %1119 = vmatpush1.bf16.msra.mxu0 %v124
    %1120 = vmatprep.subr.bf16.mxu0 0
    %1121 = vmatpush1.bf16.msra.mxu0 0
    %1122 = vmatprep.subr.bf16.mxu0 0
    %1123 = vmatpush1.bf16.msra.mxu0 0
    %1124 = vmatprep.subr.bf16.mxu0 0
    %1125 = vmatpush1.bf16.msra.mxu0 0
    %1126 = vmatprep.subr.bf16.mxu0 0
    %1127 = vmatpush1.bf16.msra.mxu0 0
    %1128 = vmatprep.subr.bf16.mxu0 0
    %1129 = vmatpush1.bf16.msra.mxu0 0
    %1130 = vmatprep.subr.bf16.mxu0 0
    %1131 = vmatpush1.bf16.msra.mxu0 0
    %1132 = vmatprep.subr.bf16.mxu0 0
    %1133 = vmatpush1.bf16.msra.mxu0 0
    %1134 = vmatprep.subr.bf16.mxu0 0
    %1135 = vmatpush1.bf16.msra.mxu0 0
    %1136 = vmatprep.mubr.bf16.mxu0 0
    %1137 = vmatmul.mubr.bf16.gmra.mrb[0].mxu0 %v1075
    %v1138 = vpop.f32.mrb[0].mxu0
    %v1139 = vadd.f32 0.0, %v1138
    %v1140 = vpop.f32.mrb[0].mxu0
    %v1141 = vadd.f32 0.0, %v1140
    %v1142 = vpop.f32.mrb[0].mxu0
    %v1143 = vadd.f32 0.0, %v1142
    %v1144 = vpop.f32.mrb[0].mxu0
    %v1145 = vadd.f32 0.0, %v1144
    %1146 = vdwg.mxu0
    %1147 = vmatprep.subr.bf16.mxu0 %v99
    %1148 = vmatpush1.bf16.msra.mxu0 %v98
    %1149 = vmatprep.subr.bf16.mxu0 %v103
    %1150 = vmatpush1.bf16.msra.mxu0 %v102
    %1151 = vmatprep.subr.bf16.mxu0 %v107
    %1152 = vmatpush1.bf16.msra.mxu0 %v106
    %1153 = vmatprep.subr.bf16.mxu0 %v111
    %1154 = vmatpush1.bf16.msra.mxu0 %v110
    %1155 = vmatprep.subr.bf16.mxu0 %v115
    %1156 = vmatpush1.bf16.msra.mxu0 %v114
    %1157 = vmatprep.subr.bf16.mxu0 %v119
    %1158 = vmatpush1.bf16.msra.mxu0 %v118
    %1159 = vmatprep.subr.bf16.mxu0 %v123
    %1160 = vmatpush1.bf16.msra.mxu0 %v122
    %1161 = vmatprep.subr.bf16.mxu0 %v127
    %1162 = vmatpush1.bf16.msra.mxu0 %v126
    %1163 = vmatprep.subr.bf16.mxu0 0
    %1164 = vmatpush1.bf16.msra.mxu0 0
    %1165 = vmatprep.subr.bf16.mxu0 0
    %1166 = vmatpush1.bf16.msra.mxu0 0
    %1167 = vmatprep.subr.bf16.mxu0 0
    %1168 = vmatpush1.bf16.msra.mxu0 0
    %1169 = vmatprep.subr.bf16.mxu0 0
    %1170 = vmatpush1.bf16.msra.mxu0 0
    %1171 = vmatprep.subr.bf16.mxu0 0
    %1172 = vmatpush1.bf16.msra.mxu0 0
    %1173 = vmatprep.subr.bf16.mxu0 0
    %1174 = vmatpush1.bf16.msra.mxu0 0
    %1175 = vmatprep.subr.bf16.mxu0 0
    %1176 = vmatpush1.bf16.msra.mxu0 0
    %1177 = vmatprep.subr.bf16.mxu0 0
    %1178 = vmatpush1.bf16.msra.mxu0 0
    %1179 = vmatprep.mubr.bf16.mxu0 0
    %1180 = vmatmul.mubr.bf16.gmra.mrb[0].mxu0 %v1075
    %v1181 = vpop.f32.mrb[0].mxu0
    %v1182 = vadd.f32 0.0, %v1181
    %v1183 = vpop.f32.mrb[0].mxu0
    %v1184 = vadd.f32 0.0, %v1183
    %v1185 = vpop.f32.mrb[0].mxu0
    %v1186 = vadd.f32 0.0, %v1185
    %v1187 = vpop.f32.mrb[0].mxu0
    %v1188 = vadd.f32 0.0, %v1187
    %1189 = vdwg.mxu0
    %v1190 = vadd.f32 %v1096, %v1139
    %v1191 = vadd.f32 %v1097, %v1141
    %v1192 = vadd.f32 %v1098, %v1182
    %v1193 = vadd.f32 %v1099, %v1184
    %v1194 = vadd.f32 %v1100, %v1143
    %v1195 = vadd.f32 %v1101, %v1145
    %v1196 = vadd.f32 %v1102, %v1186
    %v1197 = vadd.f32 %v1103, %v1188
    %v1198 = vmul.f32 %v1190, 0.5
    %v1199 = vmul.f32 %v1191, 0.5
    %v1200 = vmul.f32 %v1192, 0.5
    %v1201 = vmul.f32 %v1194, 0.5
    %v1202 = vmul.f32 %v1195, 0.5
    %v1203 = vmul.f32 %v1196, 0.5
    %v1204 = vtanh.pop %v1198
    %v1205 = vtanh.pop %v1199
    %v1206 = vtanh.pop %v1200
    %v1207 = vtanh.pop %v1201
    %v1208 = vtanh.pop %v1202
    %v1209 = vtanh.pop %v1203
    %v1210 = vmul.f32 %v1204, 0.5
    %v1211 = vmul.f32 %v1205, 0.5
    %v1212 = vmul.f32 %v1206, 0.5
    %v1213 = vmul.f32 %v1207, 0.5
    %v1214 = vmul.f32 %v1208, 0.5
    %v1215 = vmul.f32 %v1209, 0.5
    %v1216 = vadd.f32 %v1210, 0.5
    %v1217 = vadd.f32 %v1211, 0.5
    %v1218 = vadd.f32 %v1212, 0.5
    %v1219 = vadd.f32 %v1213, 0.5
    %v1220 = vadd.f32 %v1214, 0.5
    %v1221 = vadd.f32 %v1215, 0.5
    %v1222 = vtanh.pop %v1193
    %v1223 = vtanh.pop %v1197
    %v1224 = vmul.f32 %v1217, %v1069
    %v1225 = vmul.f32 %v1220, %v1070
    %v1226 = vmul.f32 %v1216, %v1222
    %v1227 = vmul.f32 %v1219, %v1223
    %v1228 = vadd.f32 %v1224, %v1226
    %v1229 = vadd.f32 %v1225, %v1227
    %v1230 = vtanh.pop %v1228
    %v1231 = vtanh.pop %v1229
    %v1232 = vmul.f32 %v1218, %v1230
    %v1233 = vmul.f32 %v1221, %v1231
    %v1234 = vpack.c.bf16 %v1233, %v1232
    %v1236 = vunpack.c.l.b16 %v1234
    %v1237 = vunpack.c.h.b16 %v1234
    %v1238 = vpack.c.b16 %v1236, %v1236
    %v1239 = vpack.c.b16 %v1237, %v1237
    %s1242 = smul.u32 %s1088, 2
    %s1243 = smul.addr %s1242, 4
    %s1244 = scalar_lea.vmem [#allocation9], %s1243
    %1245 = vst [vmem:[%s1244] sm:$0xf] %v1238
    %1246 = vst [vmem:[%s1244 + $0x4] sm:$0xf] %v1239
    %s1247 = scalar_select %p128, 0, 7
    %s1248 = smul.u32 %s1247, 8
    %s1249 = smul.addr %s1248, 4
    %s1250 = scalar_lea.vmem [#allocation6], %s1249
    %v1251 = vld [vmem:[%s1250] sm:$0xff]
    %v1252 = vld [vmem:[%s1250 + $0x8] sm:$0xff]
    %v1253 = vld [vmem:[%s1250 + $0x10] sm:$0xff]
    %v1254 = vld [vmem:[%s1250 + $0x18] sm:$0xff]
    %v1255 = vunpack.c.l.bf16 %v1251
    %v1256 = vunpack.c.h.bf16 %v1251
    %v1257 = vunpack.c.l.bf16 %v1252
    %v1258 = vunpack.c.h.bf16 %v1252
    %v1259 = vunpack.c.l.bf16 %v1253
    %v1260 = vunpack.c.h.bf16 %v1253
    %v1261 = vunpack.c.l.bf16 %v1254
    %v1262 = vunpack.c.h.bf16 %v1254
    %1263 = vmatprep.subr.bf16.mxu0 %v97
    %1264 = vmatpush1.bf16.msra.mxu0 %v96
    %1265 = vmatprep.subr.bf16.mxu0 %v101
    %1266 = vmatpush1.bf16.msra.mxu0 %v100
    %1267 = vmatprep.subr.bf16.mxu0 %v105
    %1268 = vmatpush1.bf16.msra.mxu0 %v104
    %1269 = vmatprep.subr.bf16.mxu0 %v109
    %1270 = vmatpush1.bf16.msra.mxu0 %v108
    %1271 = vmatprep.subr.bf16.mxu0 %v113
    %1272 = vmatpush1.bf16.msra.mxu0 %v112
    %1273 = vmatprep.subr.bf16.mxu0 %v117
    %1274 = vmatpush1.bf16.msra.mxu0 %v116
    %1275 = vmatprep.subr.bf16.mxu0 %v121
    %1276 = vmatpush1.bf16.msra.mxu0 %v120
    %1277 = vmatprep.subr.bf16.mxu0 %v125
    %1278 = vmatpush1.bf16.msra.mxu0 %v124
    %1279 = vmatprep.subr.bf16.mxu0 0
    %1280 = vmatpush1.bf16.msra.mxu0 0
    %1281 = vmatprep.subr.bf16.mxu0 0
    %1282 = vmatpush1.bf16.msra.mxu0 0
    %1283 = vmatprep.subr.bf16.mxu0 0
    %1284 = vmatpush1.bf16.msra.mxu0 0
    %1285 = vmatprep.subr.bf16.mxu0 0
    %1286 = vmatpush1.bf16.msra.mxu0 0
    %1287 = vmatprep.subr.bf16.mxu0 0
    %1288 = vmatpush1.bf16.msra.mxu0 0
    %1289 = vmatprep.subr.bf16.mxu0 0
    %1290 = vmatpush1.bf16.msra.mxu0 0
    %1291 = vmatprep.subr.bf16.mxu0 0
    %1292 = vmatpush1.bf16.msra.mxu0 0
    %1293 = vmatprep.subr.bf16.mxu0 0
    %1294 = vmatpush1.bf16.msra.mxu0 0
    %1295 = vmatprep.mubr.bf16.mxu0 0
    %1296 = vmatmul.mubr.bf16.gmra.mrb[0].mxu0 %v1234
    %v1297 = vpop.f32.mrb[0].mxu0
    %v1298 = vadd.f32 0.0, %v1297
    %v1299 = vpop.f32.mrb[0].mxu0
    %v1300 = vadd.f32 0.0, %v1299
    %v1301 = vpop.f32.mrb[0].mxu0
    %v1302 = vadd.f32 0.0, %v1301
    %v1303 = vpop.f32.mrb[0].mxu0
    %v1304 = vadd.f32 0.0, %v1303
    %1305 = vdwg.mxu0
    %1306 = vmatprep.subr.bf16.mxu0 %v99
    %1307 = vmatpush1.bf16.msra.mxu0 %v98
    %1308 = vmatprep.subr.bf16.mxu0 %v103
    %1309 = vmatpush1.bf16.msra.mxu0 %v102
    %1310 = vmatprep.subr.bf16.mxu0 %v107
    %1311 = vmatpush1.bf16.msra.mxu0 %v106
    %1312 = vmatprep.subr.bf16.mxu0 %v111
    %1313 = vmatpush1.bf16.msra.mxu0 %v110
    %1314 = vmatprep.subr.bf16.mxu0 %v115
    %1315 = vmatpush1.bf16.msra.mxu0 %v114
    %1316 = vmatprep.subr.bf16.mxu0 %v119
    %1317 = vmatpush1.bf16.msra.mxu0 %v118
    %1318 = vmatprep.subr.bf16.mxu0 %v123
    %1319 = vmatpush1.bf16.msra.mxu0 %v122
    %1320 = vmatprep.subr.bf16.mxu0 %v127
    %1321 = vmatpush1.bf16.msra.mxu0 %v126
    %1322 = vmatprep.subr.bf16.mxu0 0
    %1323 = vmatpush1.bf16.msra.mxu0 0
    %1324 = vmatprep.subr.bf16.mxu0 0
    %1325 = vmatpush1.bf16.msra.mxu0 0
    %1326 = vmatprep.subr.bf16.mxu0 0
    %1327 = vmatpush1.bf16.msra.mxu0 0
    %1328 = vmatprep.subr.bf16.mxu0 0
    %1329 = vmatpush1.bf16.msra.mxu0 0
    %1330 = vmatprep.subr.bf16.mxu0 0
    %1331 = vmatpush1.bf16.msra.mxu0 0
    %1332 = vmatprep.subr.bf16.mxu0 0
    %1333 = vmatpush1.bf16.msra.mxu0 0
    %1334 = vmatprep.subr.bf16.mxu0 0
    %1335 = vmatpush1.bf16.msra.mxu0 0
    %1336 = vmatprep.subr.bf16.mxu0 0
    %1337 = vmatpush1.bf16.msra.mxu0 0
    %1338 = vmatprep.mubr.bf16.mxu0 0
    %1339 = vmatmul.mubr.bf16.gmra.mrb[0].mxu0 %v1234
    %v1340 = vpop.f32.mrb[0].mxu0
    %v1341 = vadd.f32 0.0, %v1340
    %v1342 = vpop.f32.mrb[0].mxu0
    %v1343 = vadd.f32 0.0, %v1342
    %v1344 = vpop.f32.mrb[0].mxu0
    %v1345 = vadd.f32 0.0, %v1344
    %v1346 = vpop.f32.mrb[0].mxu0
    %v1347 = vadd.f32 0.0, %v1346
    %1348 = vdwg.mxu0
    %v1349 = vadd.f32 %v1255, %v1298
    %v1350 = vadd.f32 %v1256, %v1300
    %v1351 = vadd.f32 %v1257, %v1341
    %v1352 = vadd.f32 %v1258, %v1343
    %v1353 = vadd.f32 %v1259, %v1302
    %v1354 = vadd.f32 %v1260, %v1304
    %v1355 = vadd.f32 %v1261, %v1345
    %v1356 = vadd.f32 %v1262, %v1347
    %v1357 = vmul.f32 %v1349, 0.5
    %v1358 = vmul.f32 %v1350, 0.5
    %v1359 = vmul.f32 %v1351, 0.5
    %v1360 = vmul.f32 %v1353, 0.5
    %v1361 = vmul.f32 %v1354, 0.5
    %v1362 = vmul.f32 %v1355, 0.5
    %v1363 = vtanh.pop %v1357
    %v1364 = vtanh.pop %v1358
    %v1365 = vtanh.pop %v1359
    %v1366 = vtanh.pop %v1360
    %v1367 = vtanh.pop %v1361
    %v1368 = vtanh.pop %v1362
    %v1369 = vmul.f32 %v1363, 0.5
    %v1370 = vmul.f32 %v1364, 0.5
    %v1371 = vmul.f32 %v1365, 0.5
    %v1372 = vmul.f32 %v1366, 0.5
    %v1373 = vmul.f32 %v1367, 0.5
    %v1374 = vmul.f32 %v1368, 0.5
    %v1375 = vadd.f32 %v1369, 0.5
    %v1376 = vadd.f32 %v1370, 0.5
    %v1377 = vadd.f32 %v1371, 0.5
    %v1378 = vadd.f32 %v1372, 0.5
    %v1379 = vadd.f32 %v1373, 0.5
    %v1380 = vadd.f32 %v1374, 0.5
    %v1381 = vtanh.pop %v1352
    %v1382 = vtanh.pop %v1356
    %v1383 = vmul.f32 %v1376, %v1228
    %v1384 = vmul.f32 %v1379, %v1229
    %v1385 = vmul.f32 %v1375, %v1381
    %v1386 = vmul.f32 %v1378, %v1382
    %v1387 = vadd.f32 %v1383, %v1385
    %v1388 = vadd.f32 %v1384, %v1386
    %v1389 = vtanh.pop %v1387
    %v1390 = vtanh.pop %v1388
    %v1391 = vmul.f32 %v1377, %v1389
    %v1392 = vmul.f32 %v1380, %v1390
    %v1393 = vpack.c.bf16 %v1392, %v1391
    %v1395 = vunpack.c.l.b16 %v1393
    %v1396 = vunpack.c.h.b16 %v1393
    %v1397 = vpack.c.b16 %v1395, %v1395
    %v1398 = vpack.c.b16 %v1396, %v1396
    %s1401 = smul.u32 %s1247, 2
    %s1402 = smul.addr %s1401, 4
    %s1403 = scalar_lea.vmem [#allocation9], %s1402
    %1404 = vst [vmem:[%s1403] sm:$0xf] %v1397
    %1405 = vst [vmem:[%s1403 + $0x4] sm:$0xf] %v1398
    %1406 = vst [vmem:[#allocation3] sm:$0xff] %v1391
    %1407 = vst [vmem:[#allocation3 + $0x8] sm:$0xff] %v1392
    %1408 = vst [vmem:[#allocation4] sm:$0xff] %v1387
    %1409 = vst [vmem:[#allocation4 + $0x8] sm:$0xff] %v1388
    // Predicated region
    $region14: #{tpu_custom_call.1} parent=1 // pred_check
      _
    $region15: #{tpu_custom_call.1} parent=1 // pred_check_branch
      %1411 = sbr.rel (0) target = $region17
    $region16: #{tpu_custom_call.1} parent=1 // pred_region
      %s1412 = ssub.s32 1, 0
      %s1413 = smul.u32 %s1412, 0
      %s1414 = ssub.s32 0, 0
      %s1415 = smul.u32 0, %s1414
      %s1416 = sadd.s32 %s1413, %s1415
      %s1417 = smul.u32 8, %s1416
      %s1419 = ssub.s32 1024, 1024
      %1420 = vsyncadd [#allocation8], %s1419
      %s1421 = smul.addr %s1417, 2
      %s1422 = smul.addr %s1421, 64
      %s1423 = scalar_lea.hbm %s2, %s1422
      %s1424 = sshll.u32 [#allocation9], 4
      %s1425 = int_to_ptr.vmem [resolvable:$true] %s1424
      %1430 = dma.vmem_to_hbm [thread:$0]  %s1425, 1024, %s1423, [#allocation8], 64, 64, 4
    $region17: #{tpu_custom_call.1} parent=1 // pred_fallthru
      _
    // Predicated region
    $region18: #{tpu_custom_call.1} parent=1 // pred_check
      _
    $region19: #{tpu_custom_call.1} parent=1 // pred_check_branch
      %1432 = sbr.rel (0) target = $region21
    $region20: #{tpu_custom_call.1} parent=1 // pred_region
      %1433 = dma.done [#allocation8], 1024
    $region21: #{tpu_custom_call.1} parent=1 // pred_fallthru
      _
    %1434 = vsyncpa [#allocation7], 1
    %1435 = vsyncpa [#allocation8], 1
  %1436 = vsyncmov [#allocation5]
  %s1437 = vpop.sfrf %1436
  %p1438 = scmp.eq.s32.totalorder %s1437, 0
  %p1439 = pneg %p1438
  %1441 = shalt.err (%p1439)

</llo_original>
